<compile_context>
chip_gen: v7x
topology: tpu7x:2x2x1
jax: 0.10.0
libtpu: 0.0.40
codegen_flags: <defaults>
</compile_context>

<pallas_src>
import math

import jax
import jax.numpy as jnp
import numpy as np
from jax.experimental import pallas as pl
from jax.experimental.pallas import tpu as pltpu

_HIGHEST = jax.lax.Precision.HIGHEST
_LANE = 128


def _round_up(x, m):
    return (x + m - 1) // m * m


def _plan_kernels(mu, sigma):
    """Host-side analysis of (mu, sigma) -> compile-time plan.

    If a prefix of >= 3 kernels shares sigma and has uniformly spaced mu (the
    KNRM default), the kernel uses the Gaussian-ratio recurrence
        act_unscaled[k +- 1] = act_unscaled[k] * exp(+-delta*mm/sigma^2)
    chained outward from the middle kernel.  The per-k scalar factors
    exp(-(mu_k^2 - mu_mid^2)/(2 sigma^2)) are pulled out of the kernel
    (plan["chain_scale"]) and applied in the JAX tail before the log1p.
    Remaining kernels (e.g. the sharp exact-match kernel) use a direct exp.
    """
    mu = np.asarray(mu, dtype=np.float64)
    sigma = np.asarray(sigma, dtype=np.float64)
    K = int(mu.shape[0])
    plan = dict(K=K, mu=mu.tolist(),
                neg_inv_2s2=(-1.0 / (2.0 * sigma * sigma)).tolist(),
                prefix=0, chain_scale=[1.0] * K)
    if K < 3:
        return plan
    delta = float(mu[1] - mu[0])
    if abs(delta) < 1e-8:
        return plan
    p = 1
    while (p < K
           and abs(float(sigma[p] - sigma[0])) <= 1e-7
           and abs(float(mu[p] - mu[p - 1]) - delta) <= 1e-6):
        p += 1
    if p < 3:
        return plan
    s2 = float(sigma[0] * sigma[0])
    r_coef = delta / s2
    mid = p // 2
    mu_mid = float(mu[mid])
    # --- f32 range guards for mm in [-1, 1] --------------------------------
    #  * per-step ratio exp(r_coef*mm) must stay finite
    #  * act_mid must not flush to zero where an outer kernel still matters
    #  * unscaled chain values (scales pulled out) must stay well below f32 max
    #  * pulled-out scales must stay in normal f32 range
    if abs(r_coef) > 60.0 or (1.0 + abs(mu_mid)) ** 2 / (2.0 * s2) > 80.0:
        return plan
    max_unscaled_e = 0.0
    scale_e = []
    for k in range(p):
        dk = float(mu[k]) - mu_mid
        mm_star = min(max(mu_mid + dk, -1.0), 1.0)   # concave max, clamped
        e = -(mm_star - mu_mid) ** 2 / (2.0 * s2) + dk * mm_star / s2
        max_unscaled_e = max(max_unscaled_e, e)
        scale_e.append(-(float(mu[k]) ** 2 - mu_mid ** 2) / (2.0 * s2))
    if max_unscaled_e > 60.0 or min(scale_e) < -80.0 or max(scale_e) > 80.0:
        return plan
    chain_scale = [1.0] * K
    for k in range(p):
        chain_scale[k] = math.exp(scale_e[k])
    plan.update(prefix=p, mid=mid, r_coef=r_coef, chain_scale=chain_scale)
    return plan


def _make_knrm_kernel(plan, mxu_precision):
    K = plan["K"]
    mu = plan["mu"]
    n2s2 = plan["neg_inv_2s2"]
    prefix = plan["prefix"]
    eps_sq = 1e-24                      # (F.normalize eps = 1e-12) squared

    def kernel(q_ref, d_ref, dmask_ref, out_ref, qn_ref):
        # q_ref:     (TB, Lq, D)      query embeddings (block constant over j)
        # d_ref:     (TB, TLd, D)     doc-embedding tile
        # dmask_ref: (TB, 1, TLd)     doc-mask tile
        # out_ref:   (K, TB*Lq, 128)  lane-resident partial soft-TF accumulator
        # qn_ref:    (TB, Lq, D)      cached normalized query (VMEM scratch)
        j = pl.program_id(1)
        tb, tld, _ = d_ref.shape
        lq = q_ref.shape[1]
        rows = tb * lq

        @pl.when(j == 0)
        def _init():
            out_ref[...] = jnp.zeros_like(out_ref)
            q = q_ref[...].astype(jnp.float32)
            qn_ref[...] = q * jax.lax.rsqrt(
                jnp.maximum(jnp.sum(q * q, axis=-1, keepdims=True), eps_sq))

        dd = d_ref[...].astype(jnp.float32)
        dn = dd * jax.lax.rsqrt(
            jnp.maximum(jnp.sum(dd * dd, axis=-1, keepdims=True), eps_sq))

        # Cosine match matrix (TB, Lq, TLd) on the MXU, f32 accumulation.
        mm_full = jnp.einsum("bqd,bkd->bqk", qn_ref[...], dn,
                             preferred_element_type=jnp.float32,
                             precision=mxu_precision)
        dm_full = dmask_ref[...].astype(jnp.float32)          # (TB, 1, TLd)

        # Strip-mine the RBF chain over 128-lane chunks so intermediates stay
        # register-resident; partial sums accumulate lane-dense into out_ref
        # (the 128->1 reduction happens once in the JAX tail).
        for c in range(tld // _LANE):
            sl = slice(c * _LANE, (c + 1) * _LANE)
            mm = mm_full[:, :, sl]                            # (TB, Lq, 128)
            dm = dm_full[:, :, sl]                            # (TB, 1, 128)

            def acc(k, act):
                out_ref[k] += act.reshape(rows, _LANE)

            if prefix >= 3:
                mid = plan["mid"]
                r_coef = plan["r_coef"]
                # Doc mask applied once; zeros propagate down the chain.
                act_mid = jnp.exp(n2s2[mid] * (mm - mu[mid]) ** 2) * dm
                acc(mid, act_mid)
                r_up = jnp.exp(r_coef * mm)                   # shared up-chain
                act = act_mid
                for k in range(mid, prefix - 1):              # mid+1 .. prefix-1
                    act = act * r_up
                    acc(k + 1, act)
                r_dn = jnp.exp(-r_coef * mm)                  # shared down-chain
                act = act_mid
                for k in range(mid, 0, -1):                   # mid-1 .. 0
                    act = act * r_dn
                    acc(k - 1, act)
                direct = range(prefix, K)
            else:
                direct = range(K)

            for k in direct:                 # e.g. the sigma=0.001 kernel
                acc(k, jnp.exp(n2s2[k] * (mm - mu[k]) ** 2) * dm)

    return kernel


def knrm_forward(query_emb, doc_emb, query_mask, doc_mask,
                 mu, sigma, dense_w, dense_b, *,
                 tb=None, tld=None, emb_dtype=jnp.float32,
                 mxu_precision=_HIGHEST):
    """KNRM forward: embeddings -> relevance score (B, 1)."""
    B, Lq, D = query_emb.shape
    _, Ld, _ = doc_emb.shape
    mu_np = np.asarray(jax.device_get(mu), dtype=np.float64)
    sigma_np = np.asarray(jax.device_get(sigma), dtype=np.float64)
    K = int(mu_np.shape[0])
    plan = _plan_kernels(mu_np, sigma_np)

    # ---- tiling / padding --------------------------------------------------
    lq_p = max(_round_up(Lq, 8), 8)
    if tb is None:
        # nb >= 2 whenever B >= 2 so both v7x TensorCores get a batch slice.
        tb = max(1, min(8, -(-B // 2)))
    b_p = _round_up(B, tb)
    if tld is None:
        ld_p = max(_round_up(Ld, _LANE), _LANE)
        cands = [t for t in (512, 256, _LANE) if ld_p % t == 0]
        # Keep doc double-buffer + chain temporaries a modest VMEM slice
        # (v7x has only 64 MiB physical / 32 MiB scoped by default).
        tld = next((t for t in cands
                    if 4 * tb * t * (2 * D + 8 * lq_p) <= (12 << 20)),
                   cands[-1])
    else:
        assert tld % _LANE == 0
        ld_p = max(_round_up(Ld, tld), tld)

    f32 = jnp.float32
    q_p = jnp.pad(query_emb.astype(emb_dtype),
                  ((0, b_p - B), (0, lq_p - Lq), (0, 0)))
    d_p = jnp.pad(doc_emb.astype(emb_dtype),
                  ((0, b_p - B), (0, ld_p - Ld), (0, 0)))
    qm_p = jnp.pad(query_mask.astype(f32), ((0, b_p - B), (0, lq_p - Lq)))
    dm_p = jnp.pad(doc_mask.astype(f32), ((0, b_p - B), (0, ld_p - Ld)))
    dm3 = dm_p[:, None, :]                                    # (B_p, 1, Ld_p)

    nb, nj = b_p // tb, ld_p // tld
    rows = tb * lq_p

    n_exp = (3 + (K - plan["prefix"])) if plan["prefix"] >= 3 else K
    cost = pl.CostEstimate(
        flops=int(2 * b_p * lq_p * ld_p * D + 6 * b_p * lq_p * ld_p * K),
        transcendentals=int(n_exp * b_p * lq_p * ld_p),
        bytes_accessed=int(q_p.size * q_p.dtype.itemsize
                           + d_p.size * d_p.dtype.itemsize
                           + 4 * dm3.size + 4 * nb * K * rows * _LANE),
    )

    # Explicit VMEM budget (generous but capped so it is safe on v7x's 64 MiB).
    vmem_est = 4 * (2 * tb * lq_p * D          # query double-buffer
                    + 2 * tb * tld * D         # doc double-buffer
                    + 2 * tb * tld             # doc-mask double-buffer
                    + 2 * K * rows * _LANE     # resident soft-TF block
                    + tb * lq_p * D            # qn scratch
                    + 6 * tb * lq_p * tld)     # mm + chain temporaries headroom
    vmem_limit = int(min(max(2 * vmem_est, 32 << 20), 64 << 20))

    grid_spec = pltpu.PrefetchScalarGridSpec(
        num_scalar_prefetch=0,
        grid=(nb, nj),
        in_specs=[
            pl.BlockSpec((tb, lq_p, D), lambda b, j: (b, 0, 0)),
            pl.BlockSpec((tb, tld, D), lambda b, j: (b, j, 0)),
            pl.BlockSpec((tb, 1, tld), lambda b, j: (b, 0, j)),
        ],
        out_specs=pl.BlockSpec((None, K, rows, _LANE), lambda b, j: (b, 0, 0, 0)),
        scratch_shapes=[
            pltpu.VMEM((tb, lq_p, D), jnp.float32),           # cached qn
        ],
    )

    soft_tf = pl.pallas_call(
        _make_knrm_kernel(plan, mxu_precision),
        out_shape=jax.ShapeDtypeStruct((nb, K, rows, _LANE), jnp.float32),
        grid_spec=grid_spec,
        compiler_params=pltpu.CompilerParams(
            dimension_semantics=("parallel", "arbitrary"),
            vmem_limit_bytes=vmem_limit),
        cost_estimate=cost,
    )(q_p, d_p, dm3)

    # ---- tiny tail in plain JAX: lane reduce, chain scale (BEFORE log1p),
    #      log-soft-TF, query mask, Lq sum, K->1 dense layer -----------------
    chain_scale = jnp.asarray(plan["chain_scale"], f32)
    soft_tf = soft_tf.reshape(nb, K, tb, lq_p, _LANE)
    soft_tf = jnp.transpose(soft_tf, (0, 2, 1, 3, 4)).reshape(b_p, K, lq_p, _LANE)
    soft_tf = jnp.sum(soft_tf, axis=-1) * chain_scale[None, :, None]
    log_tf = jnp.log(jnp.maximum(soft_tf, 1e-6) + 1.0)        # clamp(min=1e-6)
    log_tf = log_tf * qm_p[:, None, :]
    feats = jnp.sum(log_tf, axis=2)[:B]                       # (B, K)
    return feats @ dense_w.reshape(K, 1).astype(f32) + dense_b.astype(f32)


def knrm_reference(query_emb, doc_emb, query_mask, doc_mask,
                   mu, sigma, dense_w, dense_b):
    """Pure-JAX reference mirroring the PyTorch forward (f32 throughout)."""
    eps = 1e-12
    qn = query_emb / jnp.maximum(
        jnp.linalg.norm(query_emb, axis=-1, keepdims=True), eps)
    dn = doc_emb / jnp.maximum(
        jnp.linalg.norm(doc_emb, axis=-1, keepdims=True), eps)
    mm = jnp.einsum("bqd,bkd->bqk", qn, dn, precision=_HIGHEST)
    cm = query_mask[:, :, None] * doc_mask[:, None, :]
    mm = mm * cm + (1.0 - cm) * (-1.0)
    mm_e = mm[..., None]                                       # (B, Lq, Ld, 1)
    act = jnp.exp(-(mm_e - mu[None, None, None, :]) ** 2
                  / (2.0 * sigma[None, None, None, :] ** 2))
    act = act * doc_mask[:, None, :, None]
    soft_tf = jnp.sum(act, axis=2)                             # (B, Lq, K)
    log_tf = jnp.log(jnp.maximum(soft_tf, 1e-6) + 1.0)
    log_tf = log_tf * query_mask[:, :, None]
    feats = jnp.sum(log_tf, axis=1)                            # (B, K)
    return feats @ dense_w.reshape(-1, 1) + dense_b            # (B, 1)


if __name__ == "__main__":
    # Small but non-trivial configuration: exercises a (2, 2) grid
    # (batch tiles x doc tiles) with padding on both query and doc.
    B, Lq, Ld, D = 4, 8, 200, 32
    vocab_size = 50
    n_kernels = 11

    key = jax.random.PRNGKey(0)
    k_emb, k_q, k_d, k_w, k_b = jax.random.split(key, 5)

    # "Pre-trained" embedding matrix; row 0 = padding.  The gather
    # (nn.Embedding lookup) stays in plain JAX glue.
    embedding_matrix = jax.random.normal(k_emb, (vocab_size, D), jnp.float32)
    embedding_matrix = embedding_matrix.at[0].set(0.0)

    query_ids = jax.random.randint(k_q, (B, Lq), 1, vocab_size)
    doc_ids = jax.random.randint(k_d, (B, Ld), 1, vocab_size)
    query_ids = query_ids.at[0, Lq - 2:].set(0)            # some padding
    doc_ids = doc_ids.at[0, Ld - 50:].set(0)
    query_mask = (query_ids != 0).astype(jnp.float32)
    doc_mask = (doc_ids != 0).astype(jnp.float32)

    # KNRM kernel parameters (PyTorch __init__ defaults).
    mus = [-0.9 + 1.8 / (n_kernels - 2) * i for i in range(n_kernels - 1)]
    mus.append(0.999)
    mu = jnp.asarray(mus, dtype=jnp.float32)
    sigma = jnp.asarray([0.1] * (n_kernels - 1) + [0.001], jnp.float32)

    # Dense layer (nn.Linear(K, 1)) weights.
    bound = 1.0 / float(np.sqrt(n_kernels))
    dense_w = jax.random.uniform(k_w, (n_kernels,), jnp.float32, -bound, bound)
    dense_b = jax.random.uniform(k_b, (1,), jnp.float32, -bound, bound)

    query_emb = jnp.take(embedding_matrix, query_ids, axis=0)   # (B, Lq, D)
    doc_emb = jnp.take(embedding_matrix, doc_ids, axis=0)       # (B, Ld, D)

    # --- default KNRM kernels: exercises the exp-saving recurrence path ----
    score = knrm_forward(query_emb, doc_emb, query_mask, doc_mask,
                         mu, sigma, dense_w, dense_b, tb=2, tld=128)
    score = jax.block_until_ready(score)
    ref = knrm_reference(query_emb, doc_emb, query_mask, doc_mask,
                         mu, sigma, dense_w, dense_b)
    assert score.shape == (B, 1)
    assert jnp.allclose(score, ref, rtol=5e-3, atol=5e-3), (score, ref)

    # --- non-uniform sigmas: exercises the generic direct-exp fallback -----
    sigma2 = jnp.asarray([0.05 + 0.01 * i for i in range(n_kernels - 1)]
                         + [0.001], jnp.float32)
    score2 = knrm_forward(query_emb, doc_emb, query_mask, doc_mask,
                          mu, sigma2, dense_w, dense_b, tb=2, tld=128)
    score2 = jax.block_until_ready(score2)
    ref2 = knrm_reference(query_emb, doc_emb, query_mask, doc_mask,
                          mu, sigma2, dense_w, dense_b)
    assert jnp.allclose(score2, ref2, rtol=5e-3, atol=5e-3), (score2, ref2)

    print("KERNEL_OK")
</pallas_src>

<mosaic_0001>
module attributes {stable_mosaic.version = 11 : i64} {
  func.func @kernel(%arg0: i32, %arg1: i32, %arg2: memref<2x8x32xf32, #tpu.memory_space<vmem>>, %arg3: memref<2x128x32xf32, #tpu.memory_space<vmem>>, %arg4: memref<2x1x128xf32, #tpu.memory_space<vmem>>, %arg5: memref<1x11x16x128xf32, #tpu.memory_space<vmem>>, %arg6: memref<2x8x32xf32, #tpu.memory_space<vmem>>) attributes {dimension_semantics = [#tpu.dimension_semantics<parallel>, #tpu.dimension_semantics<arbitrary>], iteration_bounds = array<i64: 2, 2>, scalar_prefetch = 0 : i64, scratch_operands = 1 : i64, tpu.core_type = #tpu.core_type<tc>, window_params = [{transform_indices = @transform_0, window_bounds = array<i64: 2, 8, 32>}, {transform_indices = @transform_1, window_bounds = array<i64: 2, 128, 32>}, {transform_indices = @transform_2, window_bounds = array<i64: 2, 1, 128>}, {transform_indices = @transform_3, window_bounds = array<i64: 1, 11, 16, 128>}]} {
    %c0_i32 = arith.constant 0 : i32
    %0 = arith.cmpi eq, %arg1, %c0_i32 : i32
    %1 = arith.extui %0 : i1 to i32
    %c0_i32_0 = arith.constant 0 : i32
    %2 = arith.cmpi ne, %1, %c0_i32_0 : i32
    scf.if %2 {
      %cst_95 = arith.constant 0.000000e+00 : f32
      %123 = vector.broadcast %cst_95 : f32 to vector<11x16x128xf32>
      %c0_96 = arith.constant 0 : index
      %c0_97 = arith.constant 0 : index
      %c0_98 = arith.constant 0 : index
      %c0_99 = arith.constant 0 : index
      %124 = vector.load %arg5[%c0_96, %c0_97, %c0_98, %c0_99] : memref<1x11x16x128xf32, #tpu.memory_space<vmem>>, vector<1x11x16x128xf32>
      %125 = vector.shape_cast %124 : vector<1x11x16x128xf32> to vector<11x16x128xf32>
      %126 = vector.shape_cast %123 : vector<11x16x128xf32> to vector<1x11x16x128xf32>
      tpu.vector_store %arg5[%c0_96, %c0_97, %c0_98, %c0_99], %126 {strides = array<i32>} : memref<1x11x16x128xf32, #tpu.memory_space<vmem>>, vector<1x11x16x128xf32>,
      %c0_100 = arith.constant 0 : index
      %c0_101 = arith.constant 0 : index
      %c0_102 = arith.constant 0 : index
      %127 = vector.load %arg2[%c0_100, %c0_101, %c0_102] : memref<2x8x32xf32, #tpu.memory_space<vmem>>, vector<2x8x32xf32>
      %128 = arith.mulf %127, %127 : vector<2x8x32xf32>
      %cst_103 = arith.constant dense<0.000000e+00> : vector<2x8xf32>
      %129 = vector.multi_reduction <add>, %128, %cst_103 [2] : vector<2x8x32xf32> to vector<2x8xf32>
      %130 = vector.shape_cast %129 : vector<2x8xf32> to vector<2x8x1xf32>
      %cst_104 = arith.constant 1.000000e-24 : f32
      %131 = vector.broadcast %cst_104 : f32 to vector<2x8x1xf32>
      %132 = arith.maximumf %130, %131 : vector<2x8x1xf32>
      %133 = math.rsqrt %132 : vector<2x8x1xf32>
      %134 = vector.broadcast %133 : vector<2x8x1xf32> to vector<2x8x32xf32>
      %135 = arith.mulf %127, %134 : vector<2x8x32xf32>
      %c0_105 = arith.constant 0 : index
      %c0_106 = arith.constant 0 : index
      %c0_107 = arith.constant 0 : index
      %136 = vector.load %arg6[%c0_105, %c0_106, %c0_107] : memref<2x8x32xf32, #tpu.memory_space<vmem>>, vector<2x8x32xf32>
      tpu.vector_store %arg6[%c0_105, %c0_106, %c0_107], %135 {strides = array<i32>} : memref<2x8x32xf32, #tpu.memory_space<vmem>>, vector<2x8x32xf32>,
    } else {
    }
    %c0 = arith.constant 0 : index
    %c0_1 = arith.constant 0 : index
    %c0_2 = arith.constant 0 : index
    %3 = vector.load %arg3[%c0, %c0_1, %c0_2] : memref<2x128x32xf32, #tpu.memory_space<vmem>>, vector<2x128x32xf32>
    %4 = arith.mulf %3, %3 : vector<2x128x32xf32>
    %cst = arith.constant dense<0.000000e+00> : vector<2x128xf32>
    %5 = vector.multi_reduction <add>, %4, %cst [2] : vector<2x128x32xf32> to vector<2x128xf32>
    %6 = vector.shape_cast %5 : vector<2x128xf32> to vector<2x128x1xf32>
    %cst_3 = arith.constant 1.000000e-24 : f32
    %7 = vector.broadcast %cst_3 : f32 to vector<2x128x1xf32>
    %8 = arith.maximumf %6, %7 : vector<2x128x1xf32>
    %9 = math.rsqrt %8 : vector<2x128x1xf32>
    %10 = vector.broadcast %9 : vector<2x128x1xf32> to vector<2x128x32xf32>
    %11 = arith.mulf %3, %10 : vector<2x128x32xf32>
    %c0_4 = arith.constant 0 : index
    %c0_5 = arith.constant 0 : index
    %c0_6 = arith.constant 0 : index
    %12 = vector.load %arg6[%c0_4, %c0_5, %c0_6] : memref<2x8x32xf32, #tpu.memory_space<vmem>>, vector<2x8x32xf32>
    "tpu.trace_start"() <{level = 10 : i32, message = "bqd,bkd->bqk"}> : () -> ()
    %cst_7 = arith.constant dense<0.000000e+00> : vector<2x8x128xf32>
    %13 = tpu.matmul %12, %11, %cst_7 {dimension_numbers = #tpu.dot_dimension_numbers<[2], [2], [1], [1], [0, 0, 0, 1, 1, 1], [0], [0]>, precision = #tpu.contract_precision<fp32>} : vector<2x8x32xf32>, vector<2x128x32xf32>, vector<2x8x128xf32> -> vector<2x8x128xf32>
    "tpu.trace_stop"() : () -> ()
    %c0_8 = arith.constant 0 : index
    %c0_9 = arith.constant 0 : index
    %c0_10 = arith.constant 0 : index
    %14 = vector.load %arg4[%c0_8, %c0_9, %c0_10] : memref<2x1x128xf32, #tpu.memory_space<vmem>>, vector<2x1x128xf32>
    %cst_11 = arith.constant 1.000000e-01 : f32
    %15 = vector.broadcast %cst_11 : f32 to vector<2x8x128xf32>
    %16 = arith.subf %13, %15 : vector<2x8x128xf32>
    %17 = arith.mulf %16, %16 : vector<2x8x128xf32>
    %cst_12 = arith.constant -5.000000e+01 : f32
    %18 = vector.broadcast %cst_12 : f32 to vector<2x8x128xf32>
    %19 = arith.mulf %18, %17 : vector<2x8x128xf32>
    %20 = math.exp %19 : vector<2x8x128xf32>
    %21 = vector.broadcast %14 : vector<2x1x128xf32> to vector<2x8x128xf32>
    %22 = arith.mulf %20, %21 : vector<2x8x128xf32>
    %c0_13 = arith.constant 0 : index
    %c5 = arith.constant 5 : index
    %c0_14 = arith.constant 0 : index
    %c0_15 = arith.constant 0 : index
    %23 = vector.load %arg5[%c0_13, %c5, %c0_14, %c0_15] : memref<1x11x16x128xf32, #tpu.memory_space<vmem>>, vector<1x1x16x128xf32>
    %24 = vector.shape_cast %23 : vector<1x1x16x128xf32> to vector<16x128xf32>
    %25 = vector.shape_cast %22 : vector<2x8x128xf32> to vector<16x128xf32>
    %26 = arith.addf %24, %25 : vector<16x128xf32>
    %c0_16 = arith.constant 0 : index
    %c5_17 = arith.constant 5 : index
    %c0_18 = arith.constant 0 : index
    %c0_19 = arith.constant 0 : index
    %27 = vector.load %arg5[%c0_16, %c5_17, %c0_18, %c0_19] : memref<1x11x16x128xf32, #tpu.memory_space<vmem>>, vector<1x1x16x128xf32>
    %28 = vector.shape_cast %27 : vector<1x1x16x128xf32> to vector<16x128xf32>
    %29 = vector.shape_cast %26 : vector<16x128xf32> to vector<1x1x16x128xf32>
    tpu.vector_store %arg5[%c0_16, %c5_17, %c0_18, %c0_19], %29 {strides = array<i32>} : memref<1x11x16x128xf32, #tpu.memory_space<vmem>>, vector<1x1x16x128xf32>,
    %cst_20 = arith.constant 19.9999981 : f32
    %30 = vector.broadcast %cst_20 : f32 to vector<2x8x128xf32>
    %31 = arith.mulf %30, %13 : vector<2x8x128xf32>
    %32 = math.exp %31 : vector<2x8x128xf32>
    %33 = arith.mulf %22, %32 : vector<2x8x128xf32>
    %c0_21 = arith.constant 0 : index
    %c6 = arith.constant 6 : index
    %c0_22 = arith.constant 0 : index
    %c0_23 = arith.constant 0 : index
    %34 = vector.load %arg5[%c0_21, %c6, %c0_22, %c0_23] : memref<1x11x16x128xf32, #tpu.memory_space<vmem>>, vector<1x1x16x128xf32>
    %35 = vector.shape_cast %34 : vector<1x1x16x128xf32> to vector<16x128xf32>
    %36 = vector.shape_cast %33 : vector<2x8x128xf32> to vector<16x128xf32>
    %37 = arith.addf %35, %36 : vector<16x128xf32>
    %c0_24 = arith.constant 0 : index
    %c6_25 = arith.constant 6 : index
    %c0_26 = arith.constant 0 : index
    %c0_27 = arith.constant 0 : index
    %38 = vector.load %arg5[%c0_24, %c6_25, %c0_26, %c0_27] : memref<1x11x16x128xf32, #tpu.memory_space<vmem>>, vector<1x1x16x128xf32>
    %39 = vector.shape_cast %38 : vector<1x1x16x128xf32> to vector<16x128xf32>
    %40 = vector.shape_cast %37 : vector<16x128xf32> to vector<1x1x16x128xf32>
    tpu.vector_store %arg5[%c0_24, %c6_25, %c0_26, %c0_27], %40 {strides = array<i32>} : memref<1x11x16x128xf32, #tpu.memory_space<vmem>>, vector<1x1x16x128xf32>,
    %41 = arith.mulf %33, %32 : vector<2x8x128xf32>
    %c0_28 = arith.constant 0 : index
    %c7 = arith.constant 7 : index
    %c0_29 = arith.constant 0 : index
    %c0_30 = arith.constant 0 : index
    %42 = vector.load %arg5[%c0_28, %c7, %c0_29, %c0_30] : memref<1x11x16x128xf32, #tpu.memory_space<vmem>>, vector<1x1x16x128xf32>
    %43 = vector.shape_cast %42 : vector<1x1x16x128xf32> to vector<16x128xf32>
    %44 = vector.shape_cast %41 : vector<2x8x128xf32> to vector<16x128xf32>
    %45 = arith.addf %43, %44 : vector<16x128xf32>
    %c0_31 = arith.constant 0 : index
    %c7_32 = arith.constant 7 : index
    %c0_33 = arith.constant 0 : index
    %c0_34 = arith.constant 0 : index
    %46 = vector.load %arg5[%c0_31, %c7_32, %c0_33, %c0_34] : memref<1x11x16x128xf32, #tpu.memory_space<vmem>>, vector<1x1x16x128xf32>
    %47 = vector.shape_cast %46 : vector<1x1x16x128xf32> to vector<16x128xf32>
    %48 = vector.shape_cast %45 : vector<16x128xf32> to vector<1x1x16x128xf32>
    tpu.vector_store %arg5[%c0_31, %c7_32, %c0_33, %c0_34], %48 {strides = array<i32>} : memref<1x11x16x128xf32, #tpu.memory_space<vmem>>, vector<1x1x16x128xf32>,
    %49 = arith.mulf %41, %32 : vector<2x8x128xf32>
    %c0_35 = arith.constant 0 : index
    %c8 = arith.constant 8 : index
    %c0_36 = arith.constant 0 : index
    %c0_37 = arith.constant 0 : index
    %50 = vector.load %arg5[%c0_35, %c8, %c0_36, %c0_37] : memref<1x11x16x128xf32, #tpu.memory_space<vmem>>, vector<1x1x16x128xf32>
    %51 = vector.shape_cast %50 : vector<1x1x16x128xf32> to vector<16x128xf32>
    %52 = vector.shape_cast %49 : vector<2x8x128xf32> to vector<16x128xf32>
    %53 = arith.addf %51, %52 : vector<16x128xf32>
    %c0_38 = arith.constant 0 : index
    %c8_39 = arith.constant 8 : index
    %c0_40 = arith.constant 0 : index
    %c0_41 = arith.constant 0 : index
    %54 = vector.load %arg5[%c0_38, %c8_39, %c0_40, %c0_41] : memref<1x11x16x128xf32, #tpu.memory_space<vmem>>, vector<1x1x16x128xf32>
    %55 = vector.shape_cast %54 : vector<1x1x16x128xf32> to vector<16x128xf32>
    %56 = vector.shape_cast %53 : vector<16x128xf32> to vector<1x1x16x128xf32>
    tpu.vector_store %arg5[%c0_38, %c8_39, %c0_40, %c0_41], %56 {strides = array<i32>} : memref<1x11x16x128xf32, #tpu.memory_space<vmem>>, vector<1x1x16x128xf32>,
    %57 = arith.mulf %49, %32 : vector<2x8x128xf32>
    %c0_42 = arith.constant 0 : index
    %c9 = arith.constant 9 : index
    %c0_43 = arith.constant 0 : index
    %c0_44 = arith.constant 0 : index
    %58 = vector.load %arg5[%c0_42, %c9, %c0_43, %c0_44] : memref<1x11x16x128xf32, #tpu.memory_space<vmem>>, vector<1x1x16x128xf32>
    %59 = vector.shape_cast %58 : vector<1x1x16x128xf32> to vector<16x128xf32>
    %60 = vector.shape_cast %57 : vector<2x8x128xf32> to vector<16x128xf32>
    %61 = arith.addf %59, %60 : vector<16x128xf32>
    %c0_45 = arith.constant 0 : index
    %c9_46 = arith.constant 9 : index
    %c0_47 = arith.constant 0 : index
    %c0_48 = arith.constant 0 : index
    %62 = vector.load %arg5[%c0_45, %c9_46, %c0_47, %c0_48] : memref<1x11x16x128xf32, #tpu.memory_space<vmem>>, vector<1x1x16x128xf32>
    %63 = vector.shape_cast %62 : vector<1x1x16x128xf32> to vector<16x128xf32>
    %64 = vector.shape_cast %61 : vector<16x128xf32> to vector<1x1x16x128xf32>
    tpu.vector_store %arg5[%c0_45, %c9_46, %c0_47, %c0_48], %64 {strides = array<i32>} : memref<1x11x16x128xf32, #tpu.memory_space<vmem>>, vector<1x1x16x128xf32>,
    %cst_49 = arith.constant -19.9999981 : f32
    %65 = vector.broadcast %cst_49 : f32 to vector<2x8x128xf32>
    %66 = arith.mulf %65, %13 : vector<2x8x128xf32>
    %67 = math.exp %66 : vector<2x8x128xf32>
    %68 = arith.mulf %22, %67 : vector<2x8x128xf32>
    %c0_50 = arith.constant 0 : index
    %c4 = arith.constant 4 : index
    %c0_51 = arith.constant 0 : index
    %c0_52 = arith.constant 0 : index
    %69 = vector.load %arg5[%c0_50, %c4, %c0_51, %c0_52] : memref<1x11x16x128xf32, #tpu.memory_space<vmem>>, vector<1x1x16x128xf32>
    %70 = vector.shape_cast %69 : vector<1x1x16x128xf32> to vector<16x128xf32>
    %71 = vector.shape_cast %68 : vector<2x8x128xf32> to vector<16x128xf32>
    %72 = arith.addf %70, %71 : vector<16x128xf32>
    %c0_53 = arith.constant 0 : index
    %c4_54 = arith.constant 4 : index
    %c0_55 = arith.constant 0 : index
    %c0_56 = arith.constant 0 : index
    %73 = vector.load %arg5[%c0_53, %c4_54, %c0_55, %c0_56] : memref<1x11x16x128xf32, #tpu.memory_space<vmem>>, vector<1x1x16x128xf32>
    %74 = vector.shape_cast %73 : vector<1x1x16x128xf32> to vector<16x128xf32>
    %75 = vector.shape_cast %72 : vector<16x128xf32> to vector<1x1x16x128xf32>
    tpu.vector_store %arg5[%c0_53, %c4_54, %c0_55, %c0_56], %75 {strides = array<i32>} : memref<1x11x16x128xf32, #tpu.memory_space<vmem>>, vector<1x1x16x128xf32>,
    %76 = arith.mulf %68, %67 : vector<2x8x128xf32>
    %c0_57 = arith.constant 0 : index
    %c3 = arith.constant 3 : index
    %c0_58 = arith.constant 0 : index
    %c0_59 = arith.constant 0 : index
    %77 = vector.load %arg5[%c0_57, %c3, %c0_58, %c0_59] : memref<1x11x16x128xf32, #tpu.memory_space<vmem>>, vector<1x1x16x128xf32>
    %78 = vector.shape_cast %77 : vector<1x1x16x128xf32> to vector<16x128xf32>
    %79 = vector.shape_cast %76 : vector<2x8x128xf32> to vector<16x128xf32>
    %80 = arith.addf %78, %79 : vector<16x128xf32>
    %c0_60 = arith.constant 0 : index
    %c3_61 = arith.constant 3 : index
    %c0_62 = arith.constant 0 : index
    %c0_63 = arith.constant 0 : index
    %81 = vector.load %arg5[%c0_60, %c3_61, %c0_62, %c0_63] : memref<1x11x16x128xf32, #tpu.memory_space<vmem>>, vector<1x1x16x128xf32>
    %82 = vector.shape_cast %81 : vector<1x1x16x128xf32> to vector<16x128xf32>
    %83 = vector.shape_cast %80 : vector<16x128xf32> to vector<1x1x16x128xf32>
    tpu.vector_store %arg5[%c0_60, %c3_61, %c0_62, %c0_63], %83 {strides = array<i32>} : memref<1x11x16x128xf32, #tpu.memory_space<vmem>>, vector<1x1x16x128xf32>,
    %84 = arith.mulf %76, %67 : vector<2x8x128xf32>
    %c0_64 = arith.constant 0 : index
    %c2 = arith.constant 2 : index
    %c0_65 = arith.constant 0 : index
    %c0_66 = arith.constant 0 : index
    %85 = vector.load %arg5[%c0_64, %c2, %c0_65, %c0_66] : memref<1x11x16x128xf32, #tpu.memory_space<vmem>>, vector<1x1x16x128xf32>
    %86 = vector.shape_cast %85 : vector<1x1x16x128xf32> to vector<16x128xf32>
    %87 = vector.shape_cast %84 : vector<2x8x128xf32> to vector<16x128xf32>
    %88 = arith.addf %86, %87 : vector<16x128xf32>
    %c0_67 = arith.constant 0 : index
    %c2_68 = arith.constant 2 : index
    %c0_69 = arith.constant 0 : index
    %c0_70 = arith.constant 0 : index
    %89 = vector.load %arg5[%c0_67, %c2_68, %c0_69, %c0_70] : memref<1x11x16x128xf32, #tpu.memory_space<vmem>>, vector<1x1x16x128xf32>
    %90 = vector.shape_cast %89 : vector<1x1x16x128xf32> to vector<16x128xf32>
    %91 = vector.shape_cast %88 : vector<16x128xf32> to vector<1x1x16x128xf32>
    tpu.vector_store %arg5[%c0_67, %c2_68, %c0_69, %c0_70], %91 {strides = array<i32>} : memref<1x11x16x128xf32, #tpu.memory_space<vmem>>, vector<1x1x16x128xf32>,
    %92 = arith.mulf %84, %67 : vector<2x8x128xf32>
    %c0_71 = arith.constant 0 : index
    %c1 = arith.constant 1 : index
    %c0_72 = arith.constant 0 : index
    %c0_73 = arith.constant 0 : index
    %93 = vector.load %arg5[%c0_71, %c1, %c0_72, %c0_73] : memref<1x11x16x128xf32, #tpu.memory_space<vmem>>, vector<1x1x16x128xf32>
    %94 = vector.shape_cast %93 : vector<1x1x16x128xf32> to vector<16x128xf32>
    %95 = vector.shape_cast %92 : vector<2x8x128xf32> to vector<16x128xf32>
    %96 = arith.addf %94, %95 : vector<16x128xf32>
    %c0_74 = arith.constant 0 : index
    %c1_75 = arith.constant 1 : index
    %c0_76 = arith.constant 0 : index
    %c0_77 = arith.constant 0 : index
    %97 = vector.load %arg5[%c0_74, %c1_75, %c0_76, %c0_77] : memref<1x11x16x128xf32, #tpu.memory_space<vmem>>, vector<1x1x16x128xf32>
    %98 = vector.shape_cast %97 : vector<1x1x16x128xf32> to vector<16x128xf32>
    %99 = vector.shape_cast %96 : vector<16x128xf32> to vector<1x1x16x128xf32>
    tpu.vector_store %arg5[%c0_74, %c1_75, %c0_76, %c0_77], %99 {strides = array<i32>} : memref<1x11x16x128xf32, #tpu.memory_space<vmem>>, vector<1x1x16x128xf32>,
    %100 = arith.mulf %92, %67 : vector<2x8x128xf32>
    %c0_78 = arith.constant 0 : index
    %c0_79 = arith.constant 0 : index
    %c0_80 = arith.constant 0 : index
    %c0_81 = arith.constant 0 : index
    %101 = vector.load %arg5[%c0_78, %c0_79, %c0_80, %c0_81] : memref<1x11x16x128xf32, #tpu.memory_space<vmem>>, vector<1x1x16x128xf32>
    %102 = vector.shape_cast %101 : vector<1x1x16x128xf32> to vector<16x128xf32>
    %103 = vector.shape_cast %100 : vector<2x8x128xf32> to vector<16x128xf32>
    %104 = arith.addf %102, %103 : vector<16x128xf32>
    %c0_82 = arith.constant 0 : index
    %c0_83 = arith.constant 0 : index
    %c0_84 = arith.constant 0 : index
    %c0_85 = arith.constant 0 : index
    %105 = vector.load %arg5[%c0_82, %c0_83, %c0_84, %c0_85] : memref<1x11x16x128xf32, #tpu.memory_space<vmem>>, vector<1x1x16x128xf32>
    %106 = vector.shape_cast %105 : vector<1x1x16x128xf32> to vector<16x128xf32>
    %107 = vector.shape_cast %104 : vector<16x128xf32> to vector<1x1x16x128xf32>
    tpu.vector_store %arg5[%c0_82, %c0_83, %c0_84, %c0_85], %107 {strides = array<i32>} : memref<1x11x16x128xf32, #tpu.memory_space<vmem>>, vector<1x1x16x128xf32>,
    %cst_86 = arith.constant 9.990000e-01 : f32
    %108 = vector.broadcast %cst_86 : f32 to vector<2x8x128xf32>
    %109 = arith.subf %13, %108 : vector<2x8x128xf32>
    %110 = arith.mulf %109, %109 : vector<2x8x128xf32>
    %cst_87 = arith.constant -499999.938 : f32
    %111 = vector.broadcast %cst_87 : f32 to vector<2x8x128xf32>
    %112 = arith.mulf %111, %110 : vector<2x8x128xf32>
    %113 = math.exp %112 : vector<2x8x128xf32>
    %114 = vector.broadcast %14 : vector<2x1x128xf32> to vector<2x8x128xf32>
    %115 = arith.mulf %113, %114 : vector<2x8x128xf32>
    %c0_88 = arith.constant 0 : index
    %c10 = arith.constant 10 : index
    %c0_89 = arith.constant 0 : index
    %c0_90 = arith.constant 0 : index
    %116 = vector.load %arg5[%c0_88, %c10, %c0_89, %c0_90] : memref<1x11x16x128xf32, #tpu.memory_space<vmem>>, vector<1x1x16x128xf32>
    %117 = vector.shape_cast %116 : vector<1x1x16x128xf32> to vector<16x128xf32>
    %118 = vector.shape_cast %115 : vector<2x8x128xf32> to vector<16x128xf32>
    %119 = arith.addf %117, %118 : vector<16x128xf32>
    %c0_91 = arith.constant 0 : index
    %c10_92 = arith.constant 10 : index
    %c0_93 = arith.constant 0 : index
    %c0_94 = arith.constant 0 : index
    %120 = vector.load %arg5[%c0_91, %c10_92, %c0_93, %c0_94] : memref<1x11x16x128xf32, #tpu.memory_space<vmem>>, vector<1x1x16x128xf32>
    %121 = vector.shape_cast %120 : vector<1x1x16x128xf32> to vector<16x128xf32>
    %122 = vector.shape_cast %119 : vector<16x128xf32> to vector<1x1x16x128xf32>
    tpu.vector_store %arg5[%c0_91, %c10_92, %c0_93, %c0_94], %122 {strides = array<i32>} : memref<1x11x16x128xf32, #tpu.memory_space<vmem>>, vector<1x1x16x128xf32>,
    return
  }
  func.func @transform_0(%arg0: i32, %arg1: i32) -> (i32, i32, i32) {
    %c0_i32 = arith.constant 0 : i32
    %c0_i32_0 = arith.constant 0 : i32
    %c0_i32_1 = arith.constant 0 : i32
    return %arg0, %c0_i32, %c0_i32_0 : i32, i32, i32
  }
  func.func @transform_1(%arg0: i32, %arg1: i32) -> (i32, i32, i32) {
    %c0_i32 = arith.constant 0 : i32
    %c0_i32_0 = arith.constant 0 : i32
    return %arg0, %arg1, %c0_i32 : i32, i32, i32
  }
  func.func @transform_2(%arg0: i32, %arg1: i32) -> (i32, i32, i32) {
    %c0_i32 = arith.constant 0 : i32
    %c0_i32_0 = arith.constant 0 : i32
    return %arg0, %c0_i32, %arg1 : i32, i32, i32
  }
  func.func @transform_3(%arg0: i32, %arg1: i32) -> (i32, i32, i32, i32) {
    %c0_i32 = arith.constant 0 : i32
    %c0_i32_0 = arith.constant 0 : i32
    %c0_i32_1 = arith.constant 0 : i32
    %c0_i32_2 = arith.constant 0 : i32
    return %arg0, %c0_i32, %c0_i32_0, %c0_i32_1 : i32, i32, i32, i32
  }
}

</mosaic_0001>

<llo_original>
// kernel: tpu_custom_call.1
$region0: #{tpu_custom_call.1}
  #allocation0 [shape = 'u32[]', space=smem, size = 0x4, offset = 0x4, fixed_abs, tag = 'smem constant byte address 0x4 - core index']
  #allocation1 [shape = 'u32[144,128]{1,0:T(1,128)}', space=vmem, size = 0x12000, scoped, tag = 'internal scratch']
  #allocation2 [shape = 'f32[2,8,32]{2,1,0:T(8,128)}', space=vmem, size = 0x2000, scoped, tag = 'scratch operand']
  %s0 = inlined_call_operand.vmem [shape: f32[4,8,32], index: 0, kind: input, shape index: {}]
  %s1 = inlined_call_operand.vmem [shape: f32[4,256,32], index: 1, kind: input, shape index: {}]
  %s2 = inlined_call_operand.vmem [shape: f32[4,1,256], index: 2, kind: input, shape index: {}]
  %s3 = inlined_call_operand.hbm [shape: f32[2,11,16,128], index: 3, kind: output, shape index: {}]
  %s4 = sld [smem:[#allocation0]]
  $region121: #{tpu_custom_call.1} parent=0
    _
  %s6 = ssub.s32 1, %s4
  %s7 = scalar_select 0, %s6, %s4
  $region1: #{tpu_custom_call.1} parent=0
    #allocation3 [shape = 'u8[262144]{0}', space=vmem, size = 0x40000, scoped, tag = 'input window, operand 1']
    #allocation4 [shape = 'u8[2048]{0}', space=vmem, size = 0x800, scoped, tag = 'input window, operand 2']
    #allocation5 [shape = 'u8[180224]{0}', space=vmem, size = 0x2c000, scoped, tag = 'output window, operand 0']
    #allocation6 [shape = 's32[2]{0}', space=sflag, size = 0x8, scoped, tag = 'scoped memory for tpu_custom_call.1']
    %8 = vsyncpa [#allocation6], 0
    %s9 = scalar_lea.sflag [#allocation6], 1
    %10 = vsyncpa %s9, 0
    loop: start=0, step=1, limit=6
    $region2: #{tpu_custom_call.1} parent=1 // loop_pre_header
      _
    $region3: #{tpu_custom_call.1} parent=1 // loop_header
      %s12 = sphi 0, %s16
      %p13 = scmp.ge.s32.totalorder %s12, 6
      %s19 = sphi 0, %s31
      %s20 = sphi 0, %s27
      %s21 = sphi 0, %s19
      %s22 = sphi 0, %s20
      %s23 = sphi 0, %s21
      %s24 = sphi 0, %s22
      %s34 = sphi 0, %s36
      %s37 = sphi 0, %s34
      %s38 = sphi 0, %s37
      %s54 = sphi 0, %s38
      %s62 = sphi 0, %s64
      %s65 = sphi 0, %s62
      %s66 = sphi 0, %s65
      %s82 = sphi 0, %s66
      %s90 = sphi 0, %s92
      %s93 = sphi 0, %s90
      %s94 = sphi 0, %s93
      %s110 = sphi 0, %s94
      %s116 = sphi 0, %s118
      %s119 = sphi 0, %s116
      %s120 = sphi 0, %s119
      %s136 = sphi 0, %s120
    $region4: #{tpu_custom_call.1} parent=1 // loop_header_branch
      %15 = sbr.rel (%p13) target = $region8
    $region5: #{tpu_custom_call.1} parent=1 // loop_body
      %s17 = ssub.s32 %s12, 1
      %s18 = ssub.s32 %s12, 2
      %s25 = sadd.s32 1, %s20
      %p26 = scmp.ge.s32.totalorder %s25, 2
      %s27 = scalar_select %p26, 0, %s25
      %s28 = sadd.s32 1, %s19
      %s29 = scalar_select %p26, %s28, %s19
      %p30 = scmp.ge.s32.totalorder %s29, 2
      %s31 = scalar_select %p30, 0, %s29
      %s32 = ssub.s32 %s19, %s31
      %p33 = scmp.eq.s32.totalorder %s32, 0
      %s35 = sadd.s32 %s34, 1
      %s36 = scalar_select %p33, %s34, %s35
      %p39 = pneg %p33
      %p40 = scmp.eq.s32.totalorder %s12, 3
      %p41 = por %p39, %p40
      %p42 = scmp.ne.s32.totalorder %s34, %s37
      %p43 = scmp.eq.s32.totalorder %s12, 0
      %p44 = por %p42, %p43
      %p45 = scmp.ne.s32.totalorder %s34, %s37
      %p46 = scmp.eq.s32.totalorder %s17, 3
      %p47 = por %p45, %p46
      %p48 = scmp.ne.s32.totalorder %s37, %s38
      %p49 = scmp.eq.s32.totalorder %s17, 0
      %p50 = por %p48, %p49
      %p51 = scmp.ne.s32.totalorder %s37, %s38
      %p52 = scmp.eq.s32.totalorder %s18, 3
      %p53 = por %p51, %p52
      %p55 = scmp.ne.s32.totalorder %s38, %s54
      %p56 = scmp.eq.s32.totalorder %s18, 0
      %p57 = por %p55, %p56
      %s58 = ssub.s32 %s19, %s31
      %s59 = ssub.s32 %s20, %s27
      %s60 = sor.u32 %s58, %s59
      %p61 = scmp.eq.s32.totalorder %s60, 0
      %s63 = sadd.s32 %s62, 1
      %s64 = scalar_select %p61, %s62, %s63
      %p67 = pneg %p61
      %p68 = scmp.eq.s32.totalorder %s12, 3
      %p69 = por %p67, %p68
      %p70 = scmp.ne.s32.totalorder %s62, %s65
      %p71 = scmp.eq.s32.totalorder %s12, 0
      %p72 = por %p70, %p71
      %p73 = scmp.ne.s32.totalorder %s62, %s65
      %p74 = scmp.eq.s32.totalorder %s17, 3
      %p75 = por %p73, %p74
      %p76 = scmp.ne.s32.totalorder %s65, %s66
      %p77 = scmp.eq.s32.totalorder %s17, 0
      %p78 = por %p76, %p77
      %p79 = scmp.ne.s32.totalorder %s65, %s66
      %p80 = scmp.eq.s32.totalorder %s18, 3
      %p81 = por %p79, %p80
      %p83 = scmp.ne.s32.totalorder %s66, %s82
      %p84 = scmp.eq.s32.totalorder %s18, 0
      %p85 = por %p83, %p84
      %s86 = ssub.s32 %s19, %s31
      %s87 = ssub.s32 %s20, %s27
      %s88 = sor.u32 %s86, %s87
      %p89 = scmp.eq.s32.totalorder %s88, 0
      %s91 = sadd.s32 %s90, 1
      %s92 = scalar_select %p89, %s90, %s91
      %p95 = pneg %p89
      %p96 = scmp.eq.s32.totalorder %s12, 3
      %p97 = por %p95, %p96
      %p98 = scmp.ne.s32.totalorder %s90, %s93
      %p99 = scmp.eq.s32.totalorder %s12, 0
      %p100 = por %p98, %p99
      %p101 = scmp.ne.s32.totalorder %s90, %s93
      %p102 = scmp.eq.s32.totalorder %s17, 3
      %p103 = por %p101, %p102
      %p104 = scmp.ne.s32.totalorder %s93, %s94
      %p105 = scmp.eq.s32.totalorder %s17, 0
      %p106 = por %p104, %p105
      %p107 = scmp.ne.s32.totalorder %s93, %s94
      %p108 = scmp.eq.s32.totalorder %s18, 3
      %p109 = por %p107, %p108
      %p111 = scmp.ne.s32.totalorder %s94, %s110
      %p112 = scmp.eq.s32.totalorder %s18, 0
      %p113 = por %p111, %p112
      %s114 = ssub.s32 %s19, %s31
      %p115 = scmp.eq.s32.totalorder %s114, 0
      %s117 = sadd.s32 %s116, 1
      %s118 = scalar_select %p115, %s116, %s117
      %p121 = pneg %p115
      %p122 = scmp.eq.s32.totalorder %s12, 3
      %p123 = por %p121, %p122
      %p124 = scmp.ne.s32.totalorder %s116, %s119
      %p125 = scmp.eq.s32.totalorder %s12, 0
      %p126 = por %p124, %p125
      %p127 = scmp.ne.s32.totalorder %s116, %s119
      %p128 = scmp.eq.s32.totalorder %s17, 3
      %p129 = por %p127, %p128
      %p130 = scmp.ne.s32.totalorder %s119, %s120
      %p131 = scmp.eq.s32.totalorder %s17, 0
      %p132 = por %p130, %p131
      %p133 = scmp.ne.s32.totalorder %s119, %s120
      %p134 = scmp.eq.s32.totalorder %s18, 3
      %p135 = por %p133, %p134
      %p137 = scmp.ne.s32.totalorder %s120, %s136
      %p138 = scmp.eq.s32.totalorder %s18, 0
      %p139 = por %p137, %p138
      %p140 = scmp.le.s32.totalorder 1, %s12
      %p141 = scmp.lt.s32.totalorder %s12, 5
      %p142 = pnand %p140, %p141
      %p143 = pneg %p142
      // Predicated region
      $region9: #{tpu_custom_call.1} parent=5 // pred_check
        _
      $region10: #{tpu_custom_call.1} parent=5 // pred_check_branch
        %145 = sbr.rel (%p142) target = $region12
      $region11: #{tpu_custom_call.1} parent=5 // pred_region
        %s146 = ssub.s32 %s12, 1
      $region12: #{tpu_custom_call.1} parent=5 // pred_fallthru
        _
      %p147 = scmp.lt.s32.totalorder %s12, 4
      // Predicated region
      $region13: #{tpu_custom_call.1} parent=5 // pred_check
        %p148 = pneg %p147
      $region14: #{tpu_custom_call.1} parent=5 // pred_check_branch
        %150 = sbr.rel (%p148) target = $region16
      $region15: #{tpu_custom_call.1} parent=5 // pred_region
        // Predicated region
        $region17: #{tpu_custom_call.1} parent=15 // pred_check
          %p151 = pneg %p44
        $region18: #{tpu_custom_call.1} parent=15 // pred_check_branch
          %153 = sbr.rel (%p151) target = $region20
        $region19: #{tpu_custom_call.1} parent=15 // pred_region
          %s154 = smul.u32 2, %s19
          %p155 = scmp.lt.s32.totalorder %s154, 3
          %s156 = scalar_select %p155, %s154, 3
          %s157 = smul.addr %s156, 8
          %s158 = scalar_lea.vmem %s0, %s157
          %s159 = smul.u32 2, %s19
        $region20: #{tpu_custom_call.1} parent=15 // pred_fallthru
          _
        // Predicated region
        $region21: #{tpu_custom_call.1} parent=15 // pred_check
          %p160 = pneg %p72
        $region22: #{tpu_custom_call.1} parent=15 // pred_check_branch
          %162 = sbr.rel (%p160) target = $region24
        $region23: #{tpu_custom_call.1} parent=15 // pred_region
          %s163 = sand.u32 %s62, 1
          %s164 = sand.u32 %s62, 1
          %s165 = smul.addr %s164, 256
          %s166 = scalar_lea.vmem [#allocation3], %s165
          %s167 = smul.u32 2, %s19
          %s168 = smul.u32 16, %s20
          %s169 = smul.addr %s167, 32
          %s170 = sadd.s32 %s168, %s169
          %s171 = smul.addr %s170, 8
          %s172 = scalar_lea.vmem %s1, %s171
          // Predicated region
          $region25: #{tpu_custom_call.1} parent=23 // pred_check
            _
          $region26: #{tpu_custom_call.1} parent=23 // pred_check_branch
            %174 = sbr.rel (0) target = $region28
          $region27: #{tpu_custom_call.1} parent=23 // pred_region
            // Predicated region
            $region29: #{tpu_custom_call.1} parent=27 // pred_check
              _
            $region30: #{tpu_custom_call.1} parent=27 // pred_check_branch
              %176 = sbr.rel (0) target = $region32
            $region31: #{tpu_custom_call.1} parent=27 // pred_region
              // Predicated region
              $region44: #{tpu_custom_call.1} parent=31 // pred_check
                _
              $region45: #{tpu_custom_call.1} parent=31 // pred_check_branch
                %253 = sbr.rel (0) target = $region47
              $region46: #{tpu_custom_call.1} parent=31 // pred_region
                loop: start=0, step=1, limit=1
                $region48: #{tpu_custom_call.1} parent=46 // loop_pre_header
                  _
                $region49: #{tpu_custom_call.1} parent=46 // loop_header
                  %s255 = sphi 0, %s259
                  %p256 = scmp.ge.s32.totalorder %s255, 1
                  %s260 = sphi %s172, %s172
                  %s261 = sphi %s166, %s166
                $region50: #{tpu_custom_call.1} parent=46 // loop_header_branch
                  %258 = sbr.rel (%p256) target = $region54
                $region51: #{tpu_custom_call.1} parent=46 // loop_body
                  %v262 = vld [vmem:[%s260] sm:$0xff]
                  %263 = vst [vmem:[%s261] sm:$0xff] %v262
                  %v264 = vld [vmem:[%s260 + $0x8] sm:$0xff]
                  %265 = vst [vmem:[%s261 + $0x8] sm:$0xff] %v264
                  %v266 = vld [vmem:[%s260 + $0x10] sm:$0xff]
                  %267 = vst [vmem:[%s261 + $0x10] sm:$0xff] %v266
                  %v268 = vld [vmem:[%s260 + $0x18] sm:$0xff]
                  %269 = vst [vmem:[%s261 + $0x18] sm:$0xff] %v268
                  %v270 = vld [vmem:[%s260 + $0x20] sm:$0xff]
                  %271 = vst [vmem:[%s261 + $0x20] sm:$0xff] %v270
                  %v272 = vld [vmem:[%s260 + $0x28] sm:$0xff]
                  %273 = vst [vmem:[%s261 + $0x28] sm:$0xff] %v272
                  %v274 = vld [vmem:[%s260 + $0x30] sm:$0xff]
                  %275 = vst [vmem:[%s261 + $0x30] sm:$0xff] %v274
                  %v276 = vld [vmem:[%s260 + $0x38] sm:$0xff]
                  %277 = vst [vmem:[%s261 + $0x38] sm:$0xff] %v276
                  %v278 = vld [vmem:[%s260 + $0x40] sm:$0xff]
                  %279 = vst [vmem:[%s261 + $0x40] sm:$0xff] %v278
                  %v280 = vld [vmem:[%s260 + $0x48] sm:$0xff]
                  %281 = vst [vmem:[%s261 + $0x48] sm:$0xff] %v280
                  %v282 = vld [vmem:[%s260 + $0x50] sm:$0xff]
                  %283 = vst [vmem:[%s261 + $0x50] sm:$0xff] %v282
                  %v284 = vld [vmem:[%s260 + $0x58] sm:$0xff]
                  %285 = vst [vmem:[%s261 + $0x58] sm:$0xff] %v284
                  %v286 = vld [vmem:[%s260 + $0x60] sm:$0xff]
                  %287 = vst [vmem:[%s261 + $0x60] sm:$0xff] %v286
                  %v288 = vld [vmem:[%s260 + $0x68] sm:$0xff]
                  %289 = vst [vmem:[%s261 + $0x68] sm:$0xff] %v288
                  %v290 = vld [vmem:[%s260 + $0x70] sm:$0xff]
                  %291 = vst [vmem:[%s261 + $0x70] sm:$0xff] %v290
                  %v292 = vld [vmem:[%s260 + $0x78] sm:$0xff]
                  %293 = vst [vmem:[%s261 + $0x78] sm:$0xff] %v292
                  %v294 = vld [vmem:[%s260 + $0x100] sm:$0xff]
                  %295 = vst [vmem:[%s261 + $0x80] sm:$0xff] %v294
                  %v296 = vld [vmem:[%s260 + $0x108] sm:$0xff]
                  %297 = vst [vmem:[%s261 + $0x88] sm:$0xff] %v296
                  %v298 = vld [vmem:[%s260 + $0x110] sm:$0xff]
                  %299 = vst [vmem:[%s261 + $0x90] sm:$0xff] %v298
                  %v300 = vld [vmem:[%s260 + $0x118] sm:$0xff]
                  %301 = vst [vmem:[%s261 + $0x98] sm:$0xff] %v300
                  %v302 = vld [vmem:[%s260 + $0x120] sm:$0xff]
                  %303 = vst [vmem:[%s261 + $0xa0] sm:$0xff] %v302
                  %v304 = vld [vmem:[%s260 + $0x128] sm:$0xff]
                  %305 = vst [vmem:[%s261 + $0xa8] sm:$0xff] %v304
                  %v306 = vld [vmem:[%s260 + $0x130] sm:$0xff]
                  %307 = vst [vmem:[%s261 + $0xb0] sm:$0xff] %v306
                  %v308 = vld [vmem:[%s260 + $0x138] sm:$0xff]
                  %309 = vst [vmem:[%s261 + $0xb8] sm:$0xff] %v308
                  %v310 = vld [vmem:[%s260 + $0x140] sm:$0xff]
                  %311 = vst [vmem:[%s261 + $0xc0] sm:$0xff] %v310
                  %v312 = vld [vmem:[%s260 + $0x148] sm:$0xff]
                  %313 = vst [vmem:[%s261 + $0xc8] sm:$0xff] %v312
                  %v314 = vld [vmem:[%s260 + $0x150] sm:$0xff]
                  %315 = vst [vmem:[%s261 + $0xd0] sm:$0xff] %v314
                  %v316 = vld [vmem:[%s260 + $0x158] sm:$0xff]
                  %317 = vst [vmem:[%s261 + $0xd8] sm:$0xff] %v316
                  %v318 = vld [vmem:[%s260 + $0x160] sm:$0xff]
                  %319 = vst [vmem:[%s261 + $0xe0] sm:$0xff] %v318
                  %v320 = vld [vmem:[%s260 + $0x168] sm:$0xff]
                  %321 = vst [vmem:[%s261 + $0xe8] sm:$0xff] %v320
                  %v322 = vld [vmem:[%s260 + $0x170] sm:$0xff]
                  %323 = vst [vmem:[%s261 + $0xf0] sm:$0xff] %v322
                  %v324 = vld [vmem:[%s260 + $0x178] sm:$0xff]
                  %325 = vst [vmem:[%s261 + $0xf8] sm:$0xff] %v324
                $region52: #{tpu_custom_call.1} parent=46 // loop_footer
                  %s259 = sadd.s32 1, %s255
                $region53: #{tpu_custom_call.1} parent=46 // loop_footer_branch
                  %254 = sbr.rel target = $region49
                $region54: #{tpu_custom_call.1} parent=46 // loop_exit
                  _
              $region47: #{tpu_custom_call.1} parent=31 // pred_fallthru
                _
              // Predicated region
              $region55: #{tpu_custom_call.1} parent=31 // pred_check
                _
              $region56: #{tpu_custom_call.1} parent=31 // pred_check_branch
                %327 = sbr.rel target = $region58
              $region57: #{tpu_custom_call.1} parent=31 // pred_region
                _
              $region58: #{tpu_custom_call.1} parent=31 // pred_fallthru
                _
            $region32: #{tpu_custom_call.1} parent=27 // pred_fallthru
              _
            // Predicated region
            $region33: #{tpu_custom_call.1} parent=27 // pred_check
              _
            $region34: #{tpu_custom_call.1} parent=27 // pred_check_branch
              %178 = sbr.rel target = $region36
            $region35: #{tpu_custom_call.1} parent=27 // pred_region
              loop: start=0, step=1, limit=1
              $region37: #{tpu_custom_call.1} parent=35 // loop_pre_header
                _
              $region38: #{tpu_custom_call.1} parent=35 // loop_header
                %s181 = sphi 0, %s185
                %p182 = scmp.ge.s32.totalorder %s181, 1
                %s186 = sphi %s172, %s172
                %s187 = sphi %s166, %s166
              $region39: #{tpu_custom_call.1} parent=35 // loop_header_branch
                %184 = sbr.rel (%p182) target = $region43
              $region40: #{tpu_custom_call.1} parent=35 // loop_body
                %v188 = vld [vmem:[%s186] sm:$0xff]
                %189 = vst [vmem:[%s187] sm:$0xff] %v188
                %v190 = vld [vmem:[%s186 + $0x8] sm:$0xff]
                %191 = vst [vmem:[%s187 + $0x8] sm:$0xff] %v190
                %v192 = vld [vmem:[%s186 + $0x10] sm:$0xff]
                %193 = vst [vmem:[%s187 + $0x10] sm:$0xff] %v192
                %v194 = vld [vmem:[%s186 + $0x18] sm:$0xff]
                %195 = vst [vmem:[%s187 + $0x18] sm:$0xff] %v194
                %v196 = vld [vmem:[%s186 + $0x20] sm:$0xff]
                %197 = vst [vmem:[%s187 + $0x20] sm:$0xff] %v196
                %v198 = vld [vmem:[%s186 + $0x28] sm:$0xff]
                %199 = vst [vmem:[%s187 + $0x28] sm:$0xff] %v198
                %v200 = vld [vmem:[%s186 + $0x30] sm:$0xff]
                %201 = vst [vmem:[%s187 + $0x30] sm:$0xff] %v200
                %v202 = vld [vmem:[%s186 + $0x38] sm:$0xff]
                %203 = vst [vmem:[%s187 + $0x38] sm:$0xff] %v202
                %v204 = vld [vmem:[%s186 + $0x40] sm:$0xff]
                %205 = vst [vmem:[%s187 + $0x40] sm:$0xff] %v204
                %v206 = vld [vmem:[%s186 + $0x48] sm:$0xff]
                %207 = vst [vmem:[%s187 + $0x48] sm:$0xff] %v206
                %v208 = vld [vmem:[%s186 + $0x50] sm:$0xff]
                %209 = vst [vmem:[%s187 + $0x50] sm:$0xff] %v208
                %v210 = vld [vmem:[%s186 + $0x58] sm:$0xff]
                %211 = vst [vmem:[%s187 + $0x58] sm:$0xff] %v210
                %v212 = vld [vmem:[%s186 + $0x60] sm:$0xff]
                %213 = vst [vmem:[%s187 + $0x60] sm:$0xff] %v212
                %v214 = vld [vmem:[%s186 + $0x68] sm:$0xff]
                %215 = vst [vmem:[%s187 + $0x68] sm:$0xff] %v214
                %v216 = vld [vmem:[%s186 + $0x70] sm:$0xff]
                %217 = vst [vmem:[%s187 + $0x70] sm:$0xff] %v216
                %v218 = vld [vmem:[%s186 + $0x78] sm:$0xff]
                %219 = vst [vmem:[%s187 + $0x78] sm:$0xff] %v218
                %v220 = vld [vmem:[%s186 + $0x100] sm:$0xff]
                %221 = vst [vmem:[%s187 + $0x80] sm:$0xff] %v220
                %v222 = vld [vmem:[%s186 + $0x108] sm:$0xff]
                %223 = vst [vmem:[%s187 + $0x88] sm:$0xff] %v222
                %v224 = vld [vmem:[%s186 + $0x110] sm:$0xff]
                %225 = vst [vmem:[%s187 + $0x90] sm:$0xff] %v224
                %v226 = vld [vmem:[%s186 + $0x118] sm:$0xff]
                %227 = vst [vmem:[%s187 + $0x98] sm:$0xff] %v226
                %v228 = vld [vmem:[%s186 + $0x120] sm:$0xff]
                %229 = vst [vmem:[%s187 + $0xa0] sm:$0xff] %v228
                %v230 = vld [vmem:[%s186 + $0x128] sm:$0xff]
                %231 = vst [vmem:[%s187 + $0xa8] sm:$0xff] %v230
                %v232 = vld [vmem:[%s186 + $0x130] sm:$0xff]
                %233 = vst [vmem:[%s187 + $0xb0] sm:$0xff] %v232
                %v234 = vld [vmem:[%s186 + $0x138] sm:$0xff]
                %235 = vst [vmem:[%s187 + $0xb8] sm:$0xff] %v234
                %v236 = vld [vmem:[%s186 + $0x140] sm:$0xff]
                %237 = vst [vmem:[%s187 + $0xc0] sm:$0xff] %v236
                %v238 = vld [vmem:[%s186 + $0x148] sm:$0xff]
                %239 = vst [vmem:[%s187 + $0xc8] sm:$0xff] %v238
                %v240 = vld [vmem:[%s186 + $0x150] sm:$0xff]
                %241 = vst [vmem:[%s187 + $0xd0] sm:$0xff] %v240
                %v242 = vld [vmem:[%s186 + $0x158] sm:$0xff]
                %243 = vst [vmem:[%s187 + $0xd8] sm:$0xff] %v242
                %v244 = vld [vmem:[%s186 + $0x160] sm:$0xff]
                %245 = vst [vmem:[%s187 + $0xe0] sm:$0xff] %v244
                %v246 = vld [vmem:[%s186 + $0x168] sm:$0xff]
                %247 = vst [vmem:[%s187 + $0xe8] sm:$0xff] %v246
                %v248 = vld [vmem:[%s186 + $0x170] sm:$0xff]
                %249 = vst [vmem:[%s187 + $0xf0] sm:$0xff] %v248
                %v250 = vld [vmem:[%s186 + $0x178] sm:$0xff]
                %251 = vst [vmem:[%s187 + $0xf8] sm:$0xff] %v250
              $region41: #{tpu_custom_call.1} parent=35 // loop_footer
                %s185 = sadd.s32 1, %s181
              $region42: #{tpu_custom_call.1} parent=35 // loop_footer_branch
                %180 = sbr.rel target = $region38
              $region43: #{tpu_custom_call.1} parent=35 // loop_exit
                _
            $region36: #{tpu_custom_call.1} parent=27 // pred_fallthru
              _
          $region28: #{tpu_custom_call.1} parent=23 // pred_fallthru
            _
          %328 = vnop
        $region24: #{tpu_custom_call.1} parent=15 // pred_fallthru
          _
        // Predicated region
        $region59: #{tpu_custom_call.1} parent=15 // pred_check
          %p329 = pneg %p100
        $region60: #{tpu_custom_call.1} parent=15 // pred_check_branch
          %331 = sbr.rel (%p329) target = $region62
        $region61: #{tpu_custom_call.1} parent=15 // pred_region
          %s332 = sand.u32 %s90, 1
          %s333 = sand.u32 %s90, 1
          %s334 = smul.addr %s333, 2
          %s335 = scalar_lea.vmem [#allocation4], %s334
          %s336 = smul.u32 2, %s19
          %s337 = smul.addr %s336, 2
          %s338 = sadd.s32 %s20, %s337
          %s339 = scalar_lea.vmem %s2, %s338
          // Predicated region
          $region63: #{tpu_custom_call.1} parent=61 // pred_check
            _
          $region64: #{tpu_custom_call.1} parent=61 // pred_check_branch
            %341 = sbr.rel (0) target = $region66
          $region65: #{tpu_custom_call.1} parent=61 // pred_region
            // Predicated region
            $region67: #{tpu_custom_call.1} parent=65 // pred_check
              _
            $region68: #{tpu_custom_call.1} parent=65 // pred_check_branch
              %343 = sbr.rel target = $region70
            $region69: #{tpu_custom_call.1} parent=65 // pred_region
              // Predicated region
              $region82: #{tpu_custom_call.1} parent=69 // pred_check
                _
              $region83: #{tpu_custom_call.1} parent=69 // pred_check_branch
                %360 = sbr.rel (0) target = $region85
              $region84: #{tpu_custom_call.1} parent=69 // pred_region
                loop: start=0, step=1, limit=1
                $region86: #{tpu_custom_call.1} parent=84 // loop_pre_header
                  _
                $region87: #{tpu_custom_call.1} parent=84 // loop_header
                  %s363 = sphi 0, %s367
                  %p364 = scmp.ge.s32.totalorder %s363, 1
                  %s368 = sphi %s339, %s339
                  %s369 = sphi %s335, %s335
                $region88: #{tpu_custom_call.1} parent=84 // loop_header_branch
                  %366 = sbr.rel (%p364) target = $region92
                $region89: #{tpu_custom_call.1} parent=84 // loop_body
                  %v370 = vld [vmem:[%s368] sm:$0x1]
                  %371 = vst [vmem:[%s369] sm:$0x1] %v370
                  %v372 = vld [vmem:[%s368 + $0x2] sm:$0x1]
                  %373 = vst [vmem:[%s369 + $0x1] sm:$0x1] %v372
                $region90: #{tpu_custom_call.1} parent=84 // loop_footer
                  %s367 = sadd.s32 1, %s363
                $region91: #{tpu_custom_call.1} parent=84 // loop_footer_branch
                  %362 = sbr.rel target = $region87
                $region92: #{tpu_custom_call.1} parent=84 // loop_exit
                  _
              $region85: #{tpu_custom_call.1} parent=69 // pred_fallthru
                _
            $region70: #{tpu_custom_call.1} parent=65 // pred_fallthru
              _
            // Predicated region
            $region71: #{tpu_custom_call.1} parent=65 // pred_check
              _
            $region72: #{tpu_custom_call.1} parent=65 // pred_check_branch
              %345 = sbr.rel (0) target = $region74
            $region73: #{tpu_custom_call.1} parent=65 // pred_region
              loop: start=0, step=1, limit=1
              $region75: #{tpu_custom_call.1} parent=73 // loop_pre_header
                _
              $region76: #{tpu_custom_call.1} parent=73 // loop_header
                %s348 = sphi 0, %s352
                %p349 = scmp.ge.s32.totalorder %s348, 1
                %s353 = sphi %s339, %s339
                %s354 = sphi %s335, %s335
              $region77: #{tpu_custom_call.1} parent=73 // loop_header_branch
                %351 = sbr.rel (%p349) target = $region81
              $region78: #{tpu_custom_call.1} parent=73 // loop_body
                %v355 = vld [vmem:[%s353] sm:$0x1]
                %356 = vst [vmem:[%s354] sm:$0x1] %v355
                %v357 = vld [vmem:[%s353 + $0x2] sm:$0x1]
                %358 = vst [vmem:[%s354 + $0x1] sm:$0x1] %v357
              $region79: #{tpu_custom_call.1} parent=73 // loop_footer
                %s352 = sadd.s32 1, %s348
              $region80: #{tpu_custom_call.1} parent=73 // loop_footer_branch
                %347 = sbr.rel target = $region76
              $region81: #{tpu_custom_call.1} parent=73 // loop_exit
                _
            $region74: #{tpu_custom_call.1} parent=65 // pred_fallthru
              _
          $region66: #{tpu_custom_call.1} parent=61 // pred_fallthru
            _
          %374 = vnop
        $region62: #{tpu_custom_call.1} parent=15 // pred_fallthru
          _
      $region16: #{tpu_custom_call.1} parent=5 // pred_fallthru
        _
      %p375 = scmp.le.s32.totalorder 1, %s12
      %p376 = scmp.lt.s32.totalorder %s12, 5
      %p377 = pnand %p375, %p376
      %p378 = pneg %p377
      // Predicated region
      $region93: #{tpu_custom_call.1} parent=5 // pred_check
        _
      $region94: #{tpu_custom_call.1} parent=5 // pred_check_branch
        %380 = sbr.rel (%p377) target = $region96
      $region95: #{tpu_custom_call.1} parent=5 // pred_region
        %s381 = ssub.s32 %s12, 1
        %s382 = sand.u32 %s65, 1
        %s383 = sand.u32 %s65, 1
        %s384 = smul.addr %s383, 256
        %s385 = scalar_lea.vmem [#allocation3], %s384
        // Predicated region
        $region97: #{tpu_custom_call.1} parent=95 // pred_check
          %p386 = pneg %p78
        $region98: #{tpu_custom_call.1} parent=95 // pred_check_branch
          %388 = sbr.rel (%p386) target = $region100
        $region99: #{tpu_custom_call.1} parent=95 // pred_region
          _
        $region100: #{tpu_custom_call.1} parent=95 // pred_fallthru
          _
        %s389 = sand.u32 %s93, 1
        %s390 = sand.u32 %s93, 1
        %s391 = smul.addr %s390, 2
        %s392 = scalar_lea.vmem [#allocation4], %s391
        // Predicated region
        $region101: #{tpu_custom_call.1} parent=95 // pred_check
          %p393 = pneg %p106
        $region102: #{tpu_custom_call.1} parent=95 // pred_check_branch
          %395 = sbr.rel (%p393) target = $region104
        $region103: #{tpu_custom_call.1} parent=95 // pred_region
          _
        $region104: #{tpu_custom_call.1} parent=95 // pred_fallthru
          _
        %s396 = smul.u32 2, %s21
        %p397 = scmp.lt.s32.totalorder %s396, 3
        %s398 = scalar_select %p397, %s396, 3
        %s399 = smul.addr %s398, 8
        %s400 = scalar_lea.vmem %s0, %s399
        %p401 = pneg %p50
        %p402 = pneg %p47
        %s403 = sand.u32 %s65, 1
        %s404 = sand.u32 %s65, 1
        %s405 = smul.addr %s404, 256
        %s406 = scalar_lea.vmem [#allocation3], %s405
        %p407 = pneg %p78
        %p408 = pneg %p75
        %s409 = sand.u32 %s93, 1
        %s410 = sand.u32 %s93, 1
        %s411 = smul.addr %s410, 2
        %s412 = scalar_lea.vmem [#allocation4], %s411
        %p413 = pneg %p106
        %p414 = pneg %p103
        %p415 = pneg %p132
        %p416 = pneg %p129
        %s417 = sand.u32 %s119, 1
        %s418 = scalar_lea.sflag [#allocation6], %s417
        %s419 = sand.u32 %s119, 1
        %s420 = smul.addr %s419, 176
        %s421 = scalar_lea.vmem [#allocation5], %s420
        %s422 = smul.u32 2, %s21
        %p423 = scmp.lt.s32.totalorder %s422, 3
        %s424 = scalar_select %p423, %s422, 3
        %s425 = smul.addr %s424, 8
        %s426 = scalar_lea.vmem %s0, %s425
        %s427 = smul.u32 2, %s21
        %s428 = smul.u32 2, %s21
        %s429 = smul.u32 16, %s22
        %s430 = smul.u32 2, %s21
        %p431 = scmp.eq.s32.totalorder %s22, 0
        // Predicated region
        $region105: #{tpu_custom_call.1} parent=95 // pred_check
          %p432 = pneg %p431
        $region106: #{tpu_custom_call.1} parent=95 // pred_check_branch
          %434 = sbr.rel (%p432) target = $region108
        $region107: #{tpu_custom_call.1} parent=95 // pred_region
          %435 = vst [vmem:[%s421] sm:$0xff] 0.0
          %436 = vst [vmem:[%s421 + $0x8] sm:$0xff] 0.0
          %437 = vst [vmem:[%s421 + $0x10] sm:$0xff] 0.0
          %438 = vst [vmem:[%s421 + $0x18] sm:$0xff] 0.0
          %439 = vst [vmem:[%s421 + $0x20] sm:$0xff] 0.0
          %440 = vst [vmem:[%s421 + $0x28] sm:$0xff] 0.0
          %441 = vst [vmem:[%s421 + $0x30] sm:$0xff] 0.0
          %442 = vst [vmem:[%s421 + $0x38] sm:$0xff] 0.0
          %443 = vst [vmem:[%s421 + $0x40] sm:$0xff] 0.0
          %444 = vst [vmem:[%s421 + $0x48] sm:$0xff] 0.0
          %445 = vst [vmem:[%s421 + $0x50] sm:$0xff] 0.0
          %446 = vst [vmem:[%s421 + $0x58] sm:$0xff] 0.0
          %447 = vst [vmem:[%s421 + $0x60] sm:$0xff] 0.0
          %448 = vst [vmem:[%s421 + $0x68] sm:$0xff] 0.0
          %449 = vst [vmem:[%s421 + $0x70] sm:$0xff] 0.0
          %450 = vst [vmem:[%s421 + $0x78] sm:$0xff] 0.0
          %451 = vst [vmem:[%s421 + $0x80] sm:$0xff] 0.0
          %452 = vst [vmem:[%s421 + $0x88] sm:$0xff] 0.0
          %453 = vst [vmem:[%s421 + $0x90] sm:$0xff] 0.0
          %454 = vst [vmem:[%s421 + $0x98] sm:$0xff] 0.0
          %455 = vst [vmem:[%s421 + $0xa0] sm:$0xff] 0.0
          %456 = vst [vmem:[%s421 + $0xa8] sm:$0xff] 0.0
          %v457 = vld [vmem:[%s426] sm:$0xff]
          %v458 = vld [vmem:[%s426 + $0x8] sm:$0xff]
          %v459 = vmul.f32 %v457, %v457
          %v460 = vmul.f32 %v458, %v458
          %vm461 = vcmask 261120
          %v462 = vsel %vm461, %v459, 0.0
          %463 = vadd.xlane.f32.xlu0 %v462
          %v464 = vpop.xlane.xlu0 %463
          %v465 = vsel %vm461, %v460, 0.0
          %466 = vadd.xlane.f32.xlu0 %v465
          %v467 = vpop.xlane.xlu0 %466
          %v468 = vmax.f32 %v464, 1e-24
          %v469 = vmax.f32 %v467, 1e-24
          %v470 = vrsqrt.pop %v468
          %v471 = vrsqrt.pop %v469
          %v472 = vmul.f32 %v457, %v470
          %v473 = vmul.f32 %v458, %v471
          %474 = vst.msk [vmem:[#allocation2] sm:$0xff] %vm461, %v472
          %475 = vst.msk [vmem:[#allocation2 + $0x8] sm:$0xff] %vm461, %v473
        $region108: #{tpu_custom_call.1} parent=95 // pred_fallthru
          _
        %v476 = vld [vmem:[%s385] sm:$0xff]
        %v477 = vld [vmem:[%s385 + $0x8] sm:$0xff]
        %v478 = vld [vmem:[%s385 + $0x10] sm:$0xff]
        %v479 = vld [vmem:[%s385 + $0x18] sm:$0xff]
        %v480 = vld [vmem:[%s385 + $0x20] sm:$0xff]
        %v481 = vld [vmem:[%s385 + $0x28] sm:$0xff]
        %v482 = vld [vmem:[%s385 + $0x30] sm:$0xff]
        %v483 = vld [vmem:[%s385 + $0x38] sm:$0xff]
        %v484 = vld [vmem:[%s385 + $0x40] sm:$0xff]
        %v485 = vld [vmem:[%s385 + $0x48] sm:$0xff]
        %v486 = vld [vmem:[%s385 + $0x50] sm:$0xff]
        %v487 = vld [vmem:[%s385 + $0x58] sm:$0xff]
        %v488 = vld [vmem:[%s385 + $0x60] sm:$0xff]
        %v489 = vld [vmem:[%s385 + $0x68] sm:$0xff]
        %v490 = vld [vmem:[%s385 + $0x70] sm:$0xff]
        %v491 = vld [vmem:[%s385 + $0x78] sm:$0xff]
        %v492 = vld [vmem:[%s385 + $0x80] sm:$0xff]
        %v493 = vld [vmem:[%s385 + $0x88] sm:$0xff]
        %v494 = vld [vmem:[%s385 + $0x90] sm:$0xff]
        %v495 = vld [vmem:[%s385 + $0x98] sm:$0xff]
        %v496 = vld [vmem:[%s385 + $0xa0] sm:$0xff]
        %v497 = vld [vmem:[%s385 + $0xa8] sm:$0xff]
        %v498 = vld [vmem:[%s385 + $0xb0] sm:$0xff]
        %v499 = vld [vmem:[%s385 + $0xb8] sm:$0xff]
        %v500 = vld [vmem:[%s385 + $0xc0] sm:$0xff]
        %v501 = vld [vmem:[%s385 + $0xc8] sm:$0xff]
        %v502 = vld [vmem:[%s385 + $0xd0] sm:$0xff]
        %v503 = vld [vmem:[%s385 + $0xd8] sm:$0xff]
        %v504 = vld [vmem:[%s385 + $0xe0] sm:$0xff]
        %v505 = vld [vmem:[%s385 + $0xe8] sm:$0xff]
        %v506 = vld [vmem:[%s385 + $0xf0] sm:$0xff]
        %v507 = vld [vmem:[%s385 + $0xf8] sm:$0xff]
        %v508 = vmul.f32 %v476, %v476
        %v509 = vmul.f32 %v477, %v477
        %v510 = vmul.f32 %v478, %v478
        %v511 = vmul.f32 %v479, %v479
        %v512 = vmul.f32 %v480, %v480
        %v513 = vmul.f32 %v481, %v481
        %v514 = vmul.f32 %v482, %v482
        %v515 = vmul.f32 %v483, %v483
        %v516 = vmul.f32 %v484, %v484
        %v517 = vmul.f32 %v485, %v485
        %v518 = vmul.f32 %v486, %v486
        %v519 = vmul.f32 %v487, %v487
        %v520 = vmul.f32 %v488, %v488
        %v521 = vmul.f32 %v489, %v489
        %v522 = vmul.f32 %v490, %v490
        %v523 = vmul.f32 %v491, %v491
        %v524 = vmul.f32 %v492, %v492
        %v525 = vmul.f32 %v493, %v493
        %v526 = vmul.f32 %v494, %v494
        %v527 = vmul.f32 %v495, %v495
        %v528 = vmul.f32 %v496, %v496
        %v529 = vmul.f32 %v497, %v497
        %v530 = vmul.f32 %v498, %v498
        %v531 = vmul.f32 %v499, %v499
        %v532 = vmul.f32 %v500, %v500
        %v533 = vmul.f32 %v501, %v501
        %v534 = vmul.f32 %v502, %v502
        %v535 = vmul.f32 %v503, %v503
        %v536 = vmul.f32 %v504, %v504
        %v537 = vmul.f32 %v505, %v505
        %v538 = vmul.f32 %v506, %v506
        %v539 = vmul.f32 %v507, %v507
        %vm540 = vcmask 261120
        %v541 = vsel %vm540, %v508, 0.0
        %542 = vadd.xlane.f32.xlu0 %v541
        %v543 = vpop.xlane.xlu0 %542
        %v544 = vsel %vm540, %v509, 0.0
        %545 = vadd.xlane.f32.xlu0 %v544
        %v546 = vpop.xlane.xlu0 %545
        %v547 = vsel %vm540, %v510, 0.0
        %548 = vadd.xlane.f32.xlu0 %v547
        %v549 = vpop.xlane.xlu0 %548
        %v550 = vsel %vm540, %v511, 0.0
        %551 = vadd.xlane.f32.xlu0 %v550
        %v552 = vpop.xlane.xlu0 %551
        %v553 = vsel %vm540, %v512, 0.0
        %554 = vadd.xlane.f32.xlu0 %v553
        %v555 = vpop.xlane.xlu0 %554
        %v556 = vsel %vm540, %v513, 0.0
        %557 = vadd.xlane.f32.xlu0 %v556
        %v558 = vpop.xlane.xlu0 %557
        %v559 = vsel %vm540, %v514, 0.0
        %560 = vadd.xlane.f32.xlu0 %v559
        %v561 = vpop.xlane.xlu0 %560
        %v562 = vsel %vm540, %v515, 0.0
        %563 = vadd.xlane.f32.xlu0 %v562
        %v564 = vpop.xlane.xlu0 %563
        %v565 = vsel %vm540, %v516, 0.0
        %566 = vadd.xlane.f32.xlu0 %v565
        %v567 = vpop.xlane.xlu0 %566
        %v568 = vsel %vm540, %v517, 0.0
        %569 = vadd.xlane.f32.xlu0 %v568
        %v570 = vpop.xlane.xlu0 %569
        %v571 = vsel %vm540, %v518, 0.0
        %572 = vadd.xlane.f32.xlu0 %v571
        %v573 = vpop.xlane.xlu0 %572
        %v574 = vsel %vm540, %v519, 0.0
        %575 = vadd.xlane.f32.xlu0 %v574
        %v576 = vpop.xlane.xlu0 %575
        %v577 = vsel %vm540, %v520, 0.0
        %578 = vadd.xlane.f32.xlu0 %v577
        %v579 = vpop.xlane.xlu0 %578
        %v580 = vsel %vm540, %v521, 0.0
        %581 = vadd.xlane.f32.xlu0 %v580
        %v582 = vpop.xlane.xlu0 %581
        %v583 = vsel %vm540, %v522, 0.0
        %584 = vadd.xlane.f32.xlu0 %v583
        %v585 = vpop.xlane.xlu0 %584
        %v586 = vsel %vm540, %v523, 0.0
        %587 = vadd.xlane.f32.xlu0 %v586
        %v588 = vpop.xlane.xlu0 %587
        %v589 = vsel %vm540, %v524, 0.0
        %590 = vadd.xlane.f32.xlu0 %v589
        %v591 = vpop.xlane.xlu0 %590
        %v592 = vsel %vm540, %v525, 0.0
        %593 = vadd.xlane.f32.xlu0 %v592
        %v594 = vpop.xlane.xlu0 %593
        %v595 = vsel %vm540, %v526, 0.0
        %596 = vadd.xlane.f32.xlu0 %v595
        %v597 = vpop.xlane.xlu0 %596
        %v598 = vsel %vm540, %v527, 0.0
        %599 = vadd.xlane.f32.xlu0 %v598
        %v600 = vpop.xlane.xlu0 %599
        %v601 = vsel %vm540, %v528, 0.0
        %602 = vadd.xlane.f32.xlu0 %v601
        %v603 = vpop.xlane.xlu0 %602
        %v604 = vsel %vm540, %v529, 0.0
        %605 = vadd.xlane.f32.xlu0 %v604
        %v606 = vpop.xlane.xlu0 %605
        %v607 = vsel %vm540, %v530, 0.0
        %608 = vadd.xlane.f32.xlu0 %v607
        %v609 = vpop.xlane.xlu0 %608
        %v610 = vsel %vm540, %v531, 0.0
        %611 = vadd.xlane.f32.xlu0 %v610
        %v612 = vpop.xlane.xlu0 %611
        %v613 = vsel %vm540, %v532, 0.0
        %614 = vadd.xlane.f32.xlu0 %v613
        %v615 = vpop.xlane.xlu0 %614
        %v616 = vsel %vm540, %v533, 0.0
        %617 = vadd.xlane.f32.xlu0 %v616
        %v618 = vpop.xlane.xlu0 %617
        %v619 = vsel %vm540, %v534, 0.0
        %620 = vadd.xlane.f32.xlu0 %v619
        %v621 = vpop.xlane.xlu0 %620
        %v622 = vsel %vm540, %v535, 0.0
        %623 = vadd.xlane.f32.xlu0 %v622
        %v624 = vpop.xlane.xlu0 %623
        %v625 = vsel %vm540, %v536, 0.0
        %626 = vadd.xlane.f32.xlu0 %v625
        %v627 = vpop.xlane.xlu0 %626
        %v628 = vsel %vm540, %v537, 0.0
        %629 = vadd.xlane.f32.xlu0 %v628
        %v630 = vpop.xlane.xlu0 %629
        %v631 = vsel %vm540, %v538, 0.0
        %632 = vadd.xlane.f32.xlu0 %v631
        %v633 = vpop.xlane.xlu0 %632
        %v634 = vsel %vm540, %v539, 0.0
        %635 = vadd.xlane.f32.xlu0 %v634
        %v636 = vpop.xlane.xlu0 %635
        %v637 = vmax.f32 %v543, 1e-24
        %v638 = vmax.f32 %v546, 1e-24
        %v639 = vmax.f32 %v549, 1e-24
        %v640 = vmax.f32 %v552, 1e-24
        %v641 = vmax.f32 %v555, 1e-24
        %v642 = vmax.f32 %v558, 1e-24
        %v643 = vmax.f32 %v561, 1e-24
        %v644 = vmax.f32 %v564, 1e-24
        %v645 = vmax.f32 %v567, 1e-24
        %v646 = vmax.f32 %v570, 1e-24
        %v647 = vmax.f32 %v573, 1e-24
        %v648 = vmax.f32 %v576, 1e-24
        %v649 = vmax.f32 %v579, 1e-24
        %v650 = vmax.f32 %v582, 1e-24
        %v651 = vmax.f32 %v585, 1e-24
        %v652 = vmax.f32 %v588, 1e-24
        %v653 = vmax.f32 %v591, 1e-24
        %v654 = vmax.f32 %v594, 1e-24
        %v655 = vmax.f32 %v597, 1e-24
        %v656 = vmax.f32 %v600, 1e-24
        %v657 = vmax.f32 %v603, 1e-24
        %v658 = vmax.f32 %v606, 1e-24
        %v659 = vmax.f32 %v609, 1e-24
        %v660 = vmax.f32 %v612, 1e-24
        %v661 = vmax.f32 %v615, 1e-24
        %v662 = vmax.f32 %v618, 1e-24
        %v663 = vmax.f32 %v621, 1e-24
        %v664 = vmax.f32 %v624, 1e-24
        %v665 = vmax.f32 %v627, 1e-24
        %v666 = vmax.f32 %v630, 1e-24
        %v667 = vmax.f32 %v633, 1e-24
        %v668 = vmax.f32 %v636, 1e-24
        %v669 = vrsqrt.pop %v637
        %v670 = vrsqrt.pop %v638
        %v671 = vrsqrt.pop %v639
        %v672 = vrsqrt.pop %v640
        %v673 = vrsqrt.pop %v641
        %v674 = vrsqrt.pop %v642
        %v675 = vrsqrt.pop %v643
        %v676 = vrsqrt.pop %v644
        %v677 = vrsqrt.pop %v645
        %v678 = vrsqrt.pop %v646
        %v679 = vrsqrt.pop %v647
        %v680 = vrsqrt.pop %v648
        %v681 = vrsqrt.pop %v649
        %v682 = vrsqrt.pop %v650
        %v683 = vrsqrt.pop %v651
        %v684 = vrsqrt.pop %v652
        %v685 = vrsqrt.pop %v653
        %v686 = vrsqrt.pop %v654
        %v687 = vrsqrt.pop %v655
        %v688 = vrsqrt.pop %v656
        %v689 = vrsqrt.pop %v657
        %v690 = vrsqrt.pop %v658
        %v691 = vrsqrt.pop %v659
        %v692 = vrsqrt.pop %v660
        %v693 = vrsqrt.pop %v661
        %v694 = vrsqrt.pop %v662
        %v695 = vrsqrt.pop %v663
        %v696 = vrsqrt.pop %v664
        %v697 = vrsqrt.pop %v665
        %v698 = vrsqrt.pop %v666
        %v699 = vrsqrt.pop %v667
        %v700 = vrsqrt.pop %v668
        %v701 = vmul.f32 %v476, %v669
        %v702 = vmul.f32 %v477, %v670
        %v703 = vmul.f32 %v478, %v671
        %v704 = vmul.f32 %v479, %v672
        %v705 = vmul.f32 %v480, %v673
        %v706 = vmul.f32 %v481, %v674
        %v707 = vmul.f32 %v482, %v675
        %v708 = vmul.f32 %v483, %v676
        %v709 = vmul.f32 %v484, %v677
        %v710 = vmul.f32 %v485, %v678
        %v711 = vmul.f32 %v486, %v679
        %v712 = vmul.f32 %v487, %v680
        %v713 = vmul.f32 %v488, %v681
        %v714 = vmul.f32 %v489, %v682
        %v715 = vmul.f32 %v490, %v683
        %v716 = vmul.f32 %v491, %v684
        %v717 = vmul.f32 %v492, %v685
        %v718 = vmul.f32 %v493, %v686
        %v719 = vmul.f32 %v494, %v687
        %v720 = vmul.f32 %v495, %v688
        %v721 = vmul.f32 %v496, %v689
        %v722 = vmul.f32 %v497, %v690
        %v723 = vmul.f32 %v498, %v691
        %v724 = vmul.f32 %v499, %v692
        %v725 = vmul.f32 %v500, %v693
        %v726 = vmul.f32 %v501, %v694
        %v727 = vmul.f32 %v502, %v695
        %v728 = vmul.f32 %v503, %v696
        %v729 = vmul.f32 %v504, %v697
        %v730 = vmul.f32 %v505, %v698
        %v731 = vmul.f32 %v506, %v699
        %v732 = vmul.f32 %v507, %v700
        %v733 = vld [vmem:[#allocation2] sm:$0xff]
        %v734 = vld [vmem:[#allocation2 + $0x8] sm:$0xff]
        %v736 = vsel %vm540, %v733, 0
        %v739 = vsel %vm540, %v701, 0
        %v742 = vsel %vm540, %v702, 0
        %v745 = vsel %vm540, %v703, 0
        %v748 = vsel %vm540, %v704, 0
        %v751 = vsel %vm540, %v705, 0
        %v754 = vsel %vm540, %v706, 0
        %v757 = vsel %vm540, %v707, 0
        %v760 = vsel %vm540, %v708, 0
        %v763 = vsel %vm540, %v709, 0
        %v766 = vsel %vm540, %v710, 0
        %v769 = vsel %vm540, %v711, 0
        %v772 = vsel %vm540, %v712, 0
        %v775 = vsel %vm540, %v713, 0
        %v778 = vsel %vm540, %v714, 0
        %v781 = vsel %vm540, %v715, 0
        %v784 = vsel %vm540, %v716, 0
        %786 = vmatprep.subr.mxu0 0.0
        %v787 = vand.u32 %v739, 4294901760
        %788 = vmatpush1.xpose.msra.mxu0 %v787
        %789 = vmatprep.subr.mxu0 0.0
        %v790 = vand.u32 %v742, 4294901760
        %791 = vmatpush1.xpose.msra.mxu0 %v790
        %792 = vmatprep.subr.mxu0 0.0
        %v793 = vand.u32 %v745, 4294901760
        %794 = vmatpush1.xpose.msra.mxu0 %v793
        %795 = vmatprep.subr.mxu0 0.0
        %v796 = vand.u32 %v748, 4294901760
        %797 = vmatpush1.xpose.msra.mxu0 %v796
        %798 = vmatprep.subr.mxu0 0.0
        %v799 = vand.u32 %v751, 4294901760
        %800 = vmatpush1.xpose.msra.mxu0 %v799
        %801 = vmatprep.subr.mxu0 0.0
        %v802 = vand.u32 %v754, 4294901760
        %803 = vmatpush1.xpose.msra.mxu0 %v802
        %804 = vmatprep.subr.mxu0 0.0
        %v805 = vand.u32 %v757, 4294901760
        %806 = vmatpush1.xpose.msra.mxu0 %v805
        %807 = vmatprep.subr.mxu0 0.0
        %v808 = vand.u32 %v760, 4294901760
        %809 = vmatpush1.xpose.msra.mxu0 %v808
        %810 = vmatprep.subr.mxu0 0.0
        %v811 = vand.u32 %v763, 4294901760
        %812 = vmatpush1.xpose.msra.mxu0 %v811
        %813 = vmatprep.subr.mxu0 0.0
        %v814 = vand.u32 %v766, 4294901760
        %815 = vmatpush1.xpose.msra.mxu0 %v814
        %816 = vmatprep.subr.mxu0 0.0
        %v817 = vand.u32 %v769, 4294901760
        %818 = vmatpush1.xpose.msra.mxu0 %v817
        %819 = vmatprep.subr.mxu0 0.0
        %v820 = vand.u32 %v772, 4294901760
        %821 = vmatpush1.xpose.msra.mxu0 %v820
        %822 = vmatprep.subr.mxu0 0.0
        %v823 = vand.u32 %v775, 4294901760
        %824 = vmatpush1.xpose.msra.mxu0 %v823
        %825 = vmatprep.subr.mxu0 0.0
        %v826 = vand.u32 %v778, 4294901760
        %827 = vmatpush1.xpose.msra.mxu0 %v826
        %828 = vmatprep.subr.mxu0 0.0
        %v829 = vand.u32 %v781, 4294901760
        %830 = vmatpush1.xpose.msra.mxu0 %v829
        %831 = vmatprep.subr.mxu0 0.0
        %v832 = vand.u32 %v784, 4294901760
        %833 = vmatpush1.xpose.msra.mxu0 %v832
        %834 = vmatprep.subr.mxu0 0.0
        %835 = vmatpush1.xpose.msra.mxu0 0.0
        %836 = vmatprep.subr.mxu0 0.0
        %837 = vmatpush1.xpose.msra.mxu0 0.0
        %838 = vmatprep.subr.mxu0 0.0
        %839 = vmatpush1.xpose.msra.mxu0 0.0
        %840 = vmatprep.subr.mxu0 0.0
        %841 = vmatpush1.xpose.msra.mxu0 0.0
        %842 = vmatprep.subr.mxu0 0.0
        %843 = vmatpush1.xpose.msra.mxu0 0.0
        %844 = vmatprep.subr.mxu0 0.0
        %845 = vmatpush1.xpose.msra.mxu0 0.0
        %846 = vmatprep.subr.mxu0 0.0
        %847 = vmatpush1.xpose.msra.mxu0 0.0
        %848 = vmatprep.subr.mxu0 0.0
        %849 = vmatpush1.xpose.msra.mxu0 0.0
        %850 = vmatprep.subr.mxu0 0.0
        %851 = vmatpush1.xpose.msra.mxu0 0.0
        %852 = vmatprep.subr.mxu0 0.0
        %853 = vmatpush1.xpose.msra.mxu0 0.0
        %854 = vmatprep.subr.mxu0 0.0
        %855 = vmatpush1.xpose.msra.mxu0 0.0
        %856 = vmatprep.subr.mxu0 0.0
        %857 = vmatpush1.xpose.msra.mxu0 0.0
        %858 = vmatprep.subr.mxu0 0.0
        %859 = vmatpush1.xpose.msra.mxu0 0.0
        %860 = vmatprep.subr.mxu0 0.0
        %861 = vmatpush1.xpose.msra.mxu0 0.0
        %862 = vmatprep.subr.mxu0 0.0
        %863 = vmatpush1.xpose.msra.mxu0 0.0
        %864 = vmatprep.subr.mxu0 0.0
        %865 = vmatpush1.xpose.msra.mxu0 0.0
        %866 = vmatprep.mubr.f32.mxu0 0.0
        %v867 = vand.u32 %v736, 4294901760
        %v868 = vsub.f32 %v736, %v867
        %v869 = vand.u32 %v868, 4294901760
        %v870 = vsub.f32 %v868, %v869
        %v871 = vand.u32 %v870, 4294901760
        %872 = vmatmul.mubr.f32.gmra.mrb[0].mxu0 %v871
        %v873 = vpop.f32.mrb[0].mxu0
        %v874 = vadd.f32 0.0, %v873
        %v875 = vpop.f32.mrb[0].mxu0
        %876 = vdwg.mxu0
        %877 = vmatprep.subr.mxu0 0.0
        %v878 = vand.u32 %v739, 4294901760
        %v879 = vsub.f32 %v739, %v878
        %v880 = vand.u32 %v879, 4294901760
        %v881 = vsub.f32 %v879, %v880
        %v882 = vand.u32 %v881, 4294901760
        %883 = vmatpush1.xpose.msra.mxu0 %v882
        %884 = vmatprep.subr.mxu0 0.0
        %v885 = vand.u32 %v742, 4294901760
        %v886 = vsub.f32 %v742, %v885
        %v887 = vand.u32 %v886, 4294901760
        %v888 = vsub.f32 %v886, %v887
        %v889 = vand.u32 %v888, 4294901760
        %890 = vmatpush1.xpose.msra.mxu0 %v889
        %891 = vmatprep.subr.mxu0 0.0
        %v892 = vand.u32 %v745, 4294901760
        %v893 = vsub.f32 %v745, %v892
        %v894 = vand.u32 %v893, 4294901760
        %v895 = vsub.f32 %v893, %v894
        %v896 = vand.u32 %v895, 4294901760
        %897 = vmatpush1.xpose.msra.mxu0 %v896
        %898 = vmatprep.subr.mxu0 0.0
        %v899 = vand.u32 %v748, 4294901760
        %v900 = vsub.f32 %v748, %v899
        %v901 = vand.u32 %v900, 4294901760
        %v902 = vsub.f32 %v900, %v901
        %v903 = vand.u32 %v902, 4294901760
        %904 = vmatpush1.xpose.msra.mxu0 %v903
        %905 = vmatprep.subr.mxu0 0.0
        %v906 = vand.u32 %v751, 4294901760
        %v907 = vsub.f32 %v751, %v906
        %v908 = vand.u32 %v907, 4294901760
        %v909 = vsub.f32 %v907, %v908
        %v910 = vand.u32 %v909, 4294901760
        %911 = vmatpush1.xpose.msra.mxu0 %v910
        %912 = vmatprep.subr.mxu0 0.0
        %v913 = vand.u32 %v754, 4294901760
        %v914 = vsub.f32 %v754, %v913
        %v915 = vand.u32 %v914, 4294901760
        %v916 = vsub.f32 %v914, %v915
        %v917 = vand.u32 %v916, 4294901760
        %918 = vmatpush1.xpose.msra.mxu0 %v917
        %919 = vmatprep.subr.mxu0 0.0
        %v920 = vand.u32 %v757, 4294901760
        %v921 = vsub.f32 %v757, %v920
        %v922 = vand.u32 %v921, 4294901760
        %v923 = vsub.f32 %v921, %v922
        %v924 = vand.u32 %v923, 4294901760
        %925 = vmatpush1.xpose.msra.mxu0 %v924
        %926 = vmatprep.subr.mxu0 0.0
        %v927 = vand.u32 %v760, 4294901760
        %v928 = vsub.f32 %v760, %v927
        %v929 = vand.u32 %v928, 4294901760
        %v930 = vsub.f32 %v928, %v929
        %v931 = vand.u32 %v930, 4294901760
        %932 = vmatpush1.xpose.msra.mxu0 %v931
        %933 = vmatprep.subr.mxu0 0.0
        %v934 = vand.u32 %v763, 4294901760
        %v935 = vsub.f32 %v763, %v934
        %v936 = vand.u32 %v935, 4294901760
        %v937 = vsub.f32 %v935, %v936
        %v938 = vand.u32 %v937, 4294901760
        %939 = vmatpush1.xpose.msra.mxu0 %v938
        %940 = vmatprep.subr.mxu0 0.0
        %v941 = vand.u32 %v766, 4294901760
        %v942 = vsub.f32 %v766, %v941
        %v943 = vand.u32 %v942, 4294901760
        %v944 = vsub.f32 %v942, %v943
        %v945 = vand.u32 %v944, 4294901760
        %946 = vmatpush1.xpose.msra.mxu0 %v945
        %947 = vmatprep.subr.mxu0 0.0
        %v948 = vand.u32 %v769, 4294901760
        %v949 = vsub.f32 %v769, %v948
        %v950 = vand.u32 %v949, 4294901760
        %v951 = vsub.f32 %v949, %v950
        %v952 = vand.u32 %v951, 4294901760
        %953 = vmatpush1.xpose.msra.mxu0 %v952
        %954 = vmatprep.subr.mxu0 0.0
        %v955 = vand.u32 %v772, 4294901760
        %v956 = vsub.f32 %v772, %v955
        %v957 = vand.u32 %v956, 4294901760
        %v958 = vsub.f32 %v956, %v957
        %v959 = vand.u32 %v958, 4294901760
        %960 = vmatpush1.xpose.msra.mxu0 %v959
        %961 = vmatprep.subr.mxu0 0.0
        %v962 = vand.u32 %v775, 4294901760
        %v963 = vsub.f32 %v775, %v962
        %v964 = vand.u32 %v963, 4294901760
        %v965 = vsub.f32 %v963, %v964
        %v966 = vand.u32 %v965, 4294901760
        %967 = vmatpush1.xpose.msra.mxu0 %v966
        %968 = vmatprep.subr.mxu0 0.0
        %v969 = vand.u32 %v778, 4294901760
        %v970 = vsub.f32 %v778, %v969
        %v971 = vand.u32 %v970, 4294901760
        %v972 = vsub.f32 %v970, %v971
        %v973 = vand.u32 %v972, 4294901760
        %974 = vmatpush1.xpose.msra.mxu0 %v973
        %975 = vmatprep.subr.mxu0 0.0
        %v976 = vand.u32 %v781, 4294901760
        %v977 = vsub.f32 %v781, %v976
        %v978 = vand.u32 %v977, 4294901760
        %v979 = vsub.f32 %v977, %v978
        %v980 = vand.u32 %v979, 4294901760
        %981 = vmatpush1.xpose.msra.mxu0 %v980
        %982 = vmatprep.subr.mxu0 0.0
        %v983 = vand.u32 %v784, 4294901760
        %v984 = vsub.f32 %v784, %v983
        %v985 = vand.u32 %v984, 4294901760
        %v986 = vsub.f32 %v984, %v985
        %v987 = vand.u32 %v986, 4294901760
        %988 = vmatpush1.xpose.msra.mxu0 %v987
        %989 = vmatprep.subr.mxu0 0.0
        %990 = vmatpush1.xpose.msra.mxu0 0.0
        %991 = vmatprep.subr.mxu0 0.0
        %992 = vmatpush1.xpose.msra.mxu0 0.0
        %993 = vmatprep.subr.mxu0 0.0
        %994 = vmatpush1.xpose.msra.mxu0 0.0
        %995 = vmatprep.subr.mxu0 0.0
        %996 = vmatpush1.xpose.msra.mxu0 0.0
        %997 = vmatprep.subr.mxu0 0.0
        %998 = vmatpush1.xpose.msra.mxu0 0.0
        %999 = vmatprep.subr.mxu0 0.0
        %1000 = vmatpush1.xpose.msra.mxu0 0.0
        %1001 = vmatprep.subr.mxu0 0.0
        %1002 = vmatpush1.xpose.msra.mxu0 0.0
        %1003 = vmatprep.subr.mxu0 0.0
        %1004 = vmatpush1.xpose.msra.mxu0 0.0
        %1005 = vmatprep.subr.mxu0 0.0
        %1006 = vmatpush1.xpose.msra.mxu0 0.0
        %1007 = vmatprep.subr.mxu0 0.0
        %1008 = vmatpush1.xpose.msra.mxu0 0.0
        %1009 = vmatprep.subr.mxu0 0.0
        %1010 = vmatpush1.xpose.msra.mxu0 0.0
        %1011 = vmatprep.subr.mxu0 0.0
        %1012 = vmatpush1.xpose.msra.mxu0 0.0
        %1013 = vmatprep.subr.mxu0 0.0
        %1014 = vmatpush1.xpose.msra.mxu0 0.0
        %1015 = vmatprep.subr.mxu0 0.0
        %1016 = vmatpush1.xpose.msra.mxu0 0.0
        %1017 = vmatprep.subr.mxu0 0.0
        %1018 = vmatpush1.xpose.msra.mxu0 0.0
        %1019 = vmatprep.subr.mxu0 0.0
        %1020 = vmatpush1.xpose.msra.mxu0 0.0
        %1021 = vmatprep.mubr.f32.mxu0 0.0
        %v1022 = vand.u32 %v736, 4294901760
        %1023 = vmatmul.mubr.f32.gmra.mrb[0].mxu0 %v1022
        %v1024 = vpop.f32.mrb[0].mxu0
        %v1025 = vadd.f32 %v874, %v1024
        %v1026 = vpop.f32.mrb[0].mxu0
        %1027 = vdwg.mxu0
        %1028 = vmatprep.subr.mxu0 0.0
        %v1029 = vand.u32 %v739, 4294901760
        %v1030 = vsub.f32 %v739, %v1029
        %1031 = vmatpush1.xpose.msra.mxu0 %v1030
        %1032 = vmatprep.subr.mxu0 0.0
        %v1033 = vand.u32 %v742, 4294901760
        %v1034 = vsub.f32 %v742, %v1033
        %1035 = vmatpush1.xpose.msra.mxu0 %v1034
        %1036 = vmatprep.subr.mxu0 0.0
        %v1037 = vand.u32 %v745, 4294901760
        %v1038 = vsub.f32 %v745, %v1037
        %1039 = vmatpush1.xpose.msra.mxu0 %v1038
        %1040 = vmatprep.subr.mxu0 0.0
        %v1041 = vand.u32 %v748, 4294901760
        %v1042 = vsub.f32 %v748, %v1041
        %1043 = vmatpush1.xpose.msra.mxu0 %v1042
        %1044 = vmatprep.subr.mxu0 0.0
        %v1045 = vand.u32 %v751, 4294901760
        %v1046 = vsub.f32 %v751, %v1045
        %1047 = vmatpush1.xpose.msra.mxu0 %v1046
        %1048 = vmatprep.subr.mxu0 0.0
        %v1049 = vand.u32 %v754, 4294901760
        %v1050 = vsub.f32 %v754, %v1049
        %1051 = vmatpush1.xpose.msra.mxu0 %v1050
        %1052 = vmatprep.subr.mxu0 0.0
        %v1053 = vand.u32 %v757, 4294901760
        %v1054 = vsub.f32 %v757, %v1053
        %1055 = vmatpush1.xpose.msra.mxu0 %v1054
        %1056 = vmatprep.subr.mxu0 0.0
        %v1057 = vand.u32 %v760, 4294901760
        %v1058 = vsub.f32 %v760, %v1057
        %1059 = vmatpush1.xpose.msra.mxu0 %v1058
        %1060 = vmatprep.subr.mxu0 0.0
        %v1061 = vand.u32 %v763, 4294901760
        %v1062 = vsub.f32 %v763, %v1061
        %1063 = vmatpush1.xpose.msra.mxu0 %v1062
        %1064 = vmatprep.subr.mxu0 0.0
        %v1065 = vand.u32 %v766, 4294901760
        %v1066 = vsub.f32 %v766, %v1065
        %1067 = vmatpush1.xpose.msra.mxu0 %v1066
        %1068 = vmatprep.subr.mxu0 0.0
        %v1069 = vand.u32 %v769, 4294901760
        %v1070 = vsub.f32 %v769, %v1069
        %1071 = vmatpush1.xpose.msra.mxu0 %v1070
        %1072 = vmatprep.subr.mxu0 0.0
        %v1073 = vand.u32 %v772, 4294901760
        %v1074 = vsub.f32 %v772, %v1073
        %1075 = vmatpush1.xpose.msra.mxu0 %v1074
        %1076 = vmatprep.subr.mxu0 0.0
        %v1077 = vand.u32 %v775, 4294901760
        %v1078 = vsub.f32 %v775, %v1077
        %1079 = vmatpush1.xpose.msra.mxu0 %v1078
        %1080 = vmatprep.subr.mxu0 0.0
        %v1081 = vand.u32 %v778, 4294901760
        %v1082 = vsub.f32 %v778, %v1081
        %1083 = vmatpush1.xpose.msra.mxu0 %v1082
        %1084 = vmatprep.subr.mxu0 0.0
        %v1085 = vand.u32 %v781, 4294901760
        %v1086 = vsub.f32 %v781, %v1085
        %1087 = vmatpush1.xpose.msra.mxu0 %v1086
        %1088 = vmatprep.subr.mxu0 0.0
        %v1089 = vand.u32 %v784, 4294901760
        %v1090 = vsub.f32 %v784, %v1089
        %1091 = vmatpush1.xpose.msra.mxu0 %v1090
        %1092 = vmatprep.subr.mxu0 0.0
        %1093 = vmatpush1.xpose.msra.mxu0 0.0
        %1094 = vmatprep.subr.mxu0 0.0
        %1095 = vmatpush1.xpose.msra.mxu0 0.0
        %1096 = vmatprep.subr.mxu0 0.0
        %1097 = vmatpush1.xpose.msra.mxu0 0.0
        %1098 = vmatprep.subr.mxu0 0.0
        %1099 = vmatpush1.xpose.msra.mxu0 0.0
        %1100 = vmatprep.subr.mxu0 0.0
        %1101 = vmatpush1.xpose.msra.mxu0 0.0
        %1102 = vmatprep.subr.mxu0 0.0
        %1103 = vmatpush1.xpose.msra.mxu0 0.0
        %1104 = vmatprep.subr.mxu0 0.0
        %1105 = vmatpush1.xpose.msra.mxu0 0.0
        %1106 = vmatprep.subr.mxu0 0.0
        %1107 = vmatpush1.xpose.msra.mxu0 0.0
        %1108 = vmatprep.subr.mxu0 0.0
        %1109 = vmatpush1.xpose.msra.mxu0 0.0
        %1110 = vmatprep.subr.mxu0 0.0
        %1111 = vmatpush1.xpose.msra.mxu0 0.0
        %1112 = vmatprep.subr.mxu0 0.0
        %1113 = vmatpush1.xpose.msra.mxu0 0.0
        %1114 = vmatprep.subr.mxu0 0.0
        %1115 = vmatpush1.xpose.msra.mxu0 0.0
        %1116 = vmatprep.subr.mxu0 0.0
        %1117 = vmatpush1.xpose.msra.mxu0 0.0
        %1118 = vmatprep.subr.mxu0 0.0
        %1119 = vmatpush1.xpose.msra.mxu0 0.0
        %1120 = vmatprep.subr.mxu0 0.0
        %1121 = vmatpush1.xpose.msra.mxu0 0.0
        %1122 = vmatprep.subr.mxu0 0.0
        %1123 = vmatpush1.xpose.msra.mxu0 0.0
        %1124 = vmatprep.mubr.f32.mxu0 0.0
        %v1125 = vand.u32 %v736, 4294901760
        %v1126 = vsub.f32 %v736, %v1125
        %1127 = vmatmul.mubr.f32.gmra.mrb[0].mxu0 %v1126
        %v1128 = vpop.f32.mrb[0].mxu0
        %v1129 = vadd.f32 %v1025, %v1128
        %v1130 = vpop.f32.mrb[0].mxu0
        %1131 = vdwg.mxu0
        %1132 = vmatprep.subr.mxu0 0.0
        %v1133 = vand.u32 %v739, 4294901760
        %1134 = vmatpush1.xpose.msra.mxu0 %v1133
        %1135 = vmatprep.subr.mxu0 0.0
        %v1136 = vand.u32 %v742, 4294901760
        %1137 = vmatpush1.xpose.msra.mxu0 %v1136
        %1138 = vmatprep.subr.mxu0 0.0
        %v1139 = vand.u32 %v745, 4294901760
        %1140 = vmatpush1.xpose.msra.mxu0 %v1139
        %1141 = vmatprep.subr.mxu0 0.0
        %v1142 = vand.u32 %v748, 4294901760
        %1143 = vmatpush1.xpose.msra.mxu0 %v1142
        %1144 = vmatprep.subr.mxu0 0.0
        %v1145 = vand.u32 %v751, 4294901760
        %1146 = vmatpush1.xpose.msra.mxu0 %v1145
        %1147 = vmatprep.subr.mxu0 0.0
        %v1148 = vand.u32 %v754, 4294901760
        %1149 = vmatpush1.xpose.msra.mxu0 %v1148
        %1150 = vmatprep.subr.mxu0 0.0
        %v1151 = vand.u32 %v757, 4294901760
        %1152 = vmatpush1.xpose.msra.mxu0 %v1151
        %1153 = vmatprep.subr.mxu0 0.0
        %v1154 = vand.u32 %v760, 4294901760
        %1155 = vmatpush1.xpose.msra.mxu0 %v1154
        %1156 = vmatprep.subr.mxu0 0.0
        %v1157 = vand.u32 %v763, 4294901760
        %1158 = vmatpush1.xpose.msra.mxu0 %v1157
        %1159 = vmatprep.subr.mxu0 0.0
        %v1160 = vand.u32 %v766, 4294901760
        %1161 = vmatpush1.xpose.msra.mxu0 %v1160
        %1162 = vmatprep.subr.mxu0 0.0
        %v1163 = vand.u32 %v769, 4294901760
        %1164 = vmatpush1.xpose.msra.mxu0 %v1163
        %1165 = vmatprep.subr.mxu0 0.0
        %v1166 = vand.u32 %v772, 4294901760
        %1167 = vmatpush1.xpose.msra.mxu0 %v1166
        %1168 = vmatprep.subr.mxu0 0.0
        %v1169 = vand.u32 %v775, 4294901760
        %1170 = vmatpush1.xpose.msra.mxu0 %v1169
        %1171 = vmatprep.subr.mxu0 0.0
        %v1172 = vand.u32 %v778, 4294901760
        %1173 = vmatpush1.xpose.msra.mxu0 %v1172
        %1174 = vmatprep.subr.mxu0 0.0
        %v1175 = vand.u32 %v781, 4294901760
        %1176 = vmatpush1.xpose.msra.mxu0 %v1175
        %1177 = vmatprep.subr.mxu0 0.0
        %v1178 = vand.u32 %v784, 4294901760
        %1179 = vmatpush1.xpose.msra.mxu0 %v1178
        %1180 = vmatprep.subr.mxu0 0.0
        %1181 = vmatpush1.xpose.msra.mxu0 0.0
        %1182 = vmatprep.subr.mxu0 0.0
        %1183 = vmatpush1.xpose.msra.mxu0 0.0
        %1184 = vmatprep.subr.mxu0 0.0
        %1185 = vmatpush1.xpose.msra.mxu0 0.0
        %1186 = vmatprep.subr.mxu0 0.0
        %1187 = vmatpush1.xpose.msra.mxu0 0.0
        %1188 = vmatprep.subr.mxu0 0.0
        %1189 = vmatpush1.xpose.msra.mxu0 0.0
        %1190 = vmatprep.subr.mxu0 0.0
        %1191 = vmatpush1.xpose.msra.mxu0 0.0
        %1192 = vmatprep.subr.mxu0 0.0
        %1193 = vmatpush1.xpose.msra.mxu0 0.0
        %1194 = vmatprep.subr.mxu0 0.0
        %1195 = vmatpush1.xpose.msra.mxu0 0.0
        %1196 = vmatprep.subr.mxu0 0.0
        %1197 = vmatpush1.xpose.msra.mxu0 0.0
        %1198 = vmatprep.subr.mxu0 0.0
        %1199 = vmatpush1.xpose.msra.mxu0 0.0
        %1200 = vmatprep.subr.mxu0 0.0
        %1201 = vmatpush1.xpose.msra.mxu0 0.0
        %1202 = vmatprep.subr.mxu0 0.0
        %1203 = vmatpush1.xpose.msra.mxu0 0.0
        %1204 = vmatprep.subr.mxu0 0.0
        %1205 = vmatpush1.xpose.msra.mxu0 0.0
        %1206 = vmatprep.subr.mxu0 0.0
        %1207 = vmatpush1.xpose.msra.mxu0 0.0
        %1208 = vmatprep.subr.mxu0 0.0
        %1209 = vmatpush1.xpose.msra.mxu0 0.0
        %1210 = vmatprep.subr.mxu0 0.0
        %1211 = vmatpush1.xpose.msra.mxu0 0.0
        %1212 = vmatprep.mubr.f32.mxu0 0.0
        %v1213 = vand.u32 %v736, 4294901760
        %v1214 = vsub.f32 %v736, %v1213
        %v1215 = vand.u32 %v1214, 4294901760
        %1216 = vmatmul.mubr.f32.gmra.mrb[0].mxu0 %v1215
        %v1217 = vpop.f32.mrb[0].mxu0
        %v1218 = vadd.f32 %v1129, %v1217
        %v1219 = vpop.f32.mrb[0].mxu0
        %1220 = vdwg.mxu0
        %1221 = vmatprep.subr.mxu0 0.0
        %v1222 = vand.u32 %v739, 4294901760
        %v1223 = vsub.f32 %v739, %v1222
        %v1224 = vand.u32 %v1223, 4294901760
        %1225 = vmatpush1.xpose.msra.mxu0 %v1224
        %1226 = vmatprep.subr.mxu0 0.0
        %v1227 = vand.u32 %v742, 4294901760
        %v1228 = vsub.f32 %v742, %v1227
        %v1229 = vand.u32 %v1228, 4294901760
        %1230 = vmatpush1.xpose.msra.mxu0 %v1229
        %1231 = vmatprep.subr.mxu0 0.0
        %v1232 = vand.u32 %v745, 4294901760
        %v1233 = vsub.f32 %v745, %v1232
        %v1234 = vand.u32 %v1233, 4294901760
        %1235 = vmatpush1.xpose.msra.mxu0 %v1234
        %1236 = vmatprep.subr.mxu0 0.0
        %v1237 = vand.u32 %v748, 4294901760
        %v1238 = vsub.f32 %v748, %v1237
        %v1239 = vand.u32 %v1238, 4294901760
        %1240 = vmatpush1.xpose.msra.mxu0 %v1239
        %1241 = vmatprep.subr.mxu0 0.0
        %v1242 = vand.u32 %v751, 4294901760
        %v1243 = vsub.f32 %v751, %v1242
        %v1244 = vand.u32 %v1243, 4294901760
        %1245 = vmatpush1.xpose.msra.mxu0 %v1244
        %1246 = vmatprep.subr.mxu0 0.0
        %v1247 = vand.u32 %v754, 4294901760
        %v1248 = vsub.f32 %v754, %v1247
        %v1249 = vand.u32 %v1248, 4294901760
        %1250 = vmatpush1.xpose.msra.mxu0 %v1249
        %1251 = vmatprep.subr.mxu0 0.0
        %v1252 = vand.u32 %v757, 4294901760
        %v1253 = vsub.f32 %v757, %v1252
        %v1254 = vand.u32 %v1253, 4294901760
        %1255 = vmatpush1.xpose.msra.mxu0 %v1254
        %1256 = vmatprep.subr.mxu0 0.0
        %v1257 = vand.u32 %v760, 4294901760
        %v1258 = vsub.f32 %v760, %v1257
        %v1259 = vand.u32 %v1258, 4294901760
        %1260 = vmatpush1.xpose.msra.mxu0 %v1259
        %1261 = vmatprep.subr.mxu0 0.0
        %v1262 = vand.u32 %v763, 4294901760
        %v1263 = vsub.f32 %v763, %v1262
        %v1264 = vand.u32 %v1263, 4294901760
        %1265 = vmatpush1.xpose.msra.mxu0 %v1264
        %1266 = vmatprep.subr.mxu0 0.0
        %v1267 = vand.u32 %v766, 4294901760
        %v1268 = vsub.f32 %v766, %v1267
        %v1269 = vand.u32 %v1268, 4294901760
        %1270 = vmatpush1.xpose.msra.mxu0 %v1269
        %1271 = vmatprep.subr.mxu0 0.0
        %v1272 = vand.u32 %v769, 4294901760
        %v1273 = vsub.f32 %v769, %v1272
        %v1274 = vand.u32 %v1273, 4294901760
        %1275 = vmatpush1.xpose.msra.mxu0 %v1274
        %1276 = vmatprep.subr.mxu0 0.0
        %v1277 = vand.u32 %v772, 4294901760
        %v1278 = vsub.f32 %v772, %v1277
        %v1279 = vand.u32 %v1278, 4294901760
        %1280 = vmatpush1.xpose.msra.mxu0 %v1279
        %1281 = vmatprep.subr.mxu0 0.0
        %v1282 = vand.u32 %v775, 4294901760
        %v1283 = vsub.f32 %v775, %v1282
        %v1284 = vand.u32 %v1283, 4294901760
        %1285 = vmatpush1.xpose.msra.mxu0 %v1284
        %1286 = vmatprep.subr.mxu0 0.0
        %v1287 = vand.u32 %v778, 4294901760
        %v1288 = vsub.f32 %v778, %v1287
        %v1289 = vand.u32 %v1288, 4294901760
        %1290 = vmatpush1.xpose.msra.mxu0 %v1289
        %1291 = vmatprep.subr.mxu0 0.0
        %v1292 = vand.u32 %v781, 4294901760
        %v1293 = vsub.f32 %v781, %v1292
        %v1294 = vand.u32 %v1293, 4294901760
        %1295 = vmatpush1.xpose.msra.mxu0 %v1294
        %1296 = vmatprep.subr.mxu0 0.0
        %v1297 = vand.u32 %v784, 4294901760
        %v1298 = vsub.f32 %v784, %v1297
        %v1299 = vand.u32 %v1298, 4294901760
        %1300 = vmatpush1.xpose.msra.mxu0 %v1299
        %1301 = vmatprep.subr.mxu0 0.0
        %1302 = vmatpush1.xpose.msra.mxu0 0.0
        %1303 = vmatprep.subr.mxu0 0.0
        %1304 = vmatpush1.xpose.msra.mxu0 0.0
        %1305 = vmatprep.subr.mxu0 0.0
        %1306 = vmatpush1.xpose.msra.mxu0 0.0
        %1307 = vmatprep.subr.mxu0 0.0
        %1308 = vmatpush1.xpose.msra.mxu0 0.0
        %1309 = vmatprep.subr.mxu0 0.0
        %1310 = vmatpush1.xpose.msra.mxu0 0.0
        %1311 = vmatprep.subr.mxu0 0.0
        %1312 = vmatpush1.xpose.msra.mxu0 0.0
        %1313 = vmatprep.subr.mxu0 0.0
        %1314 = vmatpush1.xpose.msra.mxu0 0.0
        %1315 = vmatprep.subr.mxu0 0.0
        %1316 = vmatpush1.xpose.msra.mxu0 0.0
        %1317 = vmatprep.subr.mxu0 0.0
        %1318 = vmatpush1.xpose.msra.mxu0 0.0
        %1319 = vmatprep.subr.mxu0 0.0
        %1320 = vmatpush1.xpose.msra.mxu0 0.0
        %1321 = vmatprep.subr.mxu0 0.0
        %1322 = vmatpush1.xpose.msra.mxu0 0.0
        %1323 = vmatprep.subr.mxu0 0.0
        %1324 = vmatpush1.xpose.msra.mxu0 0.0
        %1325 = vmatprep.subr.mxu0 0.0
        %1326 = vmatpush1.xpose.msra.mxu0 0.0
        %1327 = vmatprep.subr.mxu0 0.0
        %1328 = vmatpush1.xpose.msra.mxu0 0.0
        %1329 = vmatprep.subr.mxu0 0.0
        %1330 = vmatpush1.xpose.msra.mxu0 0.0
        %1331 = vmatprep.subr.mxu0 0.0
        %1332 = vmatpush1.xpose.msra.mxu0 0.0
        %1333 = vmatprep.mubr.f32.mxu0 0.0
        %v1334 = vand.u32 %v736, 4294901760
        %1335 = vmatmul.mubr.f32.gmra.mrb[0].mxu0 %v1334
        %v1336 = vpop.f32.mrb[0].mxu0
        %v1337 = vadd.f32 %v1218, %v1336
        %v1338 = vpop.f32.mrb[0].mxu0
        %1339 = vdwg.mxu0
        %1340 = vmatprep.subr.mxu0 0.0
        %v1341 = vand.u32 %v739, 4294901760
        %1342 = vmatpush1.xpose.msra.mxu0 %v1341
        %1343 = vmatprep.subr.mxu0 0.0
        %v1344 = vand.u32 %v742, 4294901760
        %1345 = vmatpush1.xpose.msra.mxu0 %v1344
        %1346 = vmatprep.subr.mxu0 0.0
        %v1347 = vand.u32 %v745, 4294901760
        %1348 = vmatpush1.xpose.msra.mxu0 %v1347
        %1349 = vmatprep.subr.mxu0 0.0
        %v1350 = vand.u32 %v748, 4294901760
        %1351 = vmatpush1.xpose.msra.mxu0 %v1350
        %1352 = vmatprep.subr.mxu0 0.0
        %v1353 = vand.u32 %v751, 4294901760
        %1354 = vmatpush1.xpose.msra.mxu0 %v1353
        %1355 = vmatprep.subr.mxu0 0.0
        %v1356 = vand.u32 %v754, 4294901760
        %1357 = vmatpush1.xpose.msra.mxu0 %v1356
        %1358 = vmatprep.subr.mxu0 0.0
        %v1359 = vand.u32 %v757, 4294901760
        %1360 = vmatpush1.xpose.msra.mxu0 %v1359
        %1361 = vmatprep.subr.mxu0 0.0
        %v1362 = vand.u32 %v760, 4294901760
        %1363 = vmatpush1.xpose.msra.mxu0 %v1362
        %1364 = vmatprep.subr.mxu0 0.0
        %v1365 = vand.u32 %v763, 4294901760
        %1366 = vmatpush1.xpose.msra.mxu0 %v1365
        %1367 = vmatprep.subr.mxu0 0.0
        %v1368 = vand.u32 %v766, 4294901760
        %1369 = vmatpush1.xpose.msra.mxu0 %v1368
        %1370 = vmatprep.subr.mxu0 0.0
        %v1371 = vand.u32 %v769, 4294901760
        %1372 = vmatpush1.xpose.msra.mxu0 %v1371
        %1373 = vmatprep.subr.mxu0 0.0
        %v1374 = vand.u32 %v772, 4294901760
        %1375 = vmatpush1.xpose.msra.mxu0 %v1374
        %1376 = vmatprep.subr.mxu0 0.0
        %v1377 = vand.u32 %v775, 4294901760
        %1378 = vmatpush1.xpose.msra.mxu0 %v1377
        %1379 = vmatprep.subr.mxu0 0.0
        %v1380 = vand.u32 %v778, 4294901760
        %1381 = vmatpush1.xpose.msra.mxu0 %v1380
        %1382 = vmatprep.subr.mxu0 0.0
        %v1383 = vand.u32 %v781, 4294901760
        %1384 = vmatpush1.xpose.msra.mxu0 %v1383
        %1385 = vmatprep.subr.mxu0 0.0
        %v1386 = vand.u32 %v784, 4294901760
        %1387 = vmatpush1.xpose.msra.mxu0 %v1386
        %1388 = vmatprep.subr.mxu0 0.0
        %1389 = vmatpush1.xpose.msra.mxu0 0.0
        %1390 = vmatprep.subr.mxu0 0.0
        %1391 = vmatpush1.xpose.msra.mxu0 0.0
        %1392 = vmatprep.subr.mxu0 0.0
        %1393 = vmatpush1.xpose.msra.mxu0 0.0
        %1394 = vmatprep.subr.mxu0 0.0
        %1395 = vmatpush1.xpose.msra.mxu0 0.0
        %1396 = vmatprep.subr.mxu0 0.0
        %1397 = vmatpush1.xpose.msra.mxu0 0.0
        %1398 = vmatprep.subr.mxu0 0.0
        %1399 = vmatpush1.xpose.msra.mxu0 0.0
        %1400 = vmatprep.subr.mxu0 0.0
        %1401 = vmatpush1.xpose.msra.mxu0 0.0
        %1402 = vmatprep.subr.mxu0 0.0
        %1403 = vmatpush1.xpose.msra.mxu0 0.0
        %1404 = vmatprep.subr.mxu0 0.0
        %1405 = vmatpush1.xpose.msra.mxu0 0.0
        %1406 = vmatprep.subr.mxu0 0.0
        %1407 = vmatpush1.xpose.msra.mxu0 0.0
        %1408 = vmatprep.subr.mxu0 0.0
        %1409 = vmatpush1.xpose.msra.mxu0 0.0
        %1410 = vmatprep.subr.mxu0 0.0
        %1411 = vmatpush1.xpose.msra.mxu0 0.0
        %1412 = vmatprep.subr.mxu0 0.0
        %1413 = vmatpush1.xpose.msra.mxu0 0.0
        %1414 = vmatprep.subr.mxu0 0.0
        %1415 = vmatpush1.xpose.msra.mxu0 0.0
        %1416 = vmatprep.subr.mxu0 0.0
        %1417 = vmatpush1.xpose.msra.mxu0 0.0
        %1418 = vmatprep.subr.mxu0 0.0
        %1419 = vmatpush1.xpose.msra.mxu0 0.0
        %1420 = vmatprep.mubr.f32.mxu0 0.0
        %v1421 = vand.u32 %v736, 4294901760
        %1422 = vmatmul.mubr.f32.gmra.mrb[0].mxu0 %v1421
        %v1423 = vpop.f32.mrb[0].mxu0
        %v1424 = vadd.f32 %v1337, %v1423
        %v1425 = vpop.f32.mrb[0].mxu0
        %1426 = vdwg.mxu0
        %v1428 = vsel %vm540, %v734, 0
        %v1431 = vsel %vm540, %v717, 0
        %v1434 = vsel %vm540, %v718, 0
        %v1437 = vsel %vm540, %v719, 0
        %v1440 = vsel %vm540, %v720, 0
        %v1443 = vsel %vm540, %v721, 0
        %v1446 = vsel %vm540, %v722, 0
        %v1449 = vsel %vm540, %v723, 0
        %v1452 = vsel %vm540, %v724, 0
        %v1455 = vsel %vm540, %v725, 0
        %v1458 = vsel %vm540, %v726, 0
        %v1461 = vsel %vm540, %v727, 0
        %v1464 = vsel %vm540, %v728, 0
        %v1467 = vsel %vm540, %v729, 0
        %v1470 = vsel %vm540, %v730, 0
        %v1473 = vsel %vm540, %v731, 0
        %v1476 = vsel %vm540, %v732, 0
        %1478 = vmatprep.subr.mxu0 0.0
        %v1479 = vand.u32 %v1431, 4294901760
        %1480 = vmatpush1.xpose.msra.mxu0 %v1479
        %1481 = vmatprep.subr.mxu0 0.0
        %v1482 = vand.u32 %v1434, 4294901760
        %1483 = vmatpush1.xpose.msra.mxu0 %v1482
        %1484 = vmatprep.subr.mxu0 0.0
        %v1485 = vand.u32 %v1437, 4294901760
        %1486 = vmatpush1.xpose.msra.mxu0 %v1485
        %1487 = vmatprep.subr.mxu0 0.0
        %v1488 = vand.u32 %v1440, 4294901760
        %1489 = vmatpush1.xpose.msra.mxu0 %v1488
        %1490 = vmatprep.subr.mxu0 0.0
        %v1491 = vand.u32 %v1443, 4294901760
        %1492 = vmatpush1.xpose.msra.mxu0 %v1491
        %1493 = vmatprep.subr.mxu0 0.0
        %v1494 = vand.u32 %v1446, 4294901760
        %1495 = vmatpush1.xpose.msra.mxu0 %v1494
        %1496 = vmatprep.subr.mxu0 0.0
        %v1497 = vand.u32 %v1449, 4294901760
        %1498 = vmatpush1.xpose.msra.mxu0 %v1497
        %1499 = vmatprep.subr.mxu0 0.0
        %v1500 = vand.u32 %v1452, 4294901760
        %1501 = vmatpush1.xpose.msra.mxu0 %v1500
        %1502 = vmatprep.subr.mxu0 0.0
        %v1503 = vand.u32 %v1455, 4294901760
        %1504 = vmatpush1.xpose.msra.mxu0 %v1503
        %1505 = vmatprep.subr.mxu0 0.0
        %v1506 = vand.u32 %v1458, 4294901760
        %1507 = vmatpush1.xpose.msra.mxu0 %v1506
        %1508 = vmatprep.subr.mxu0 0.0
        %v1509 = vand.u32 %v1461, 4294901760
        %1510 = vmatpush1.xpose.msra.mxu0 %v1509
        %1511 = vmatprep.subr.mxu0 0.0
        %v1512 = vand.u32 %v1464, 4294901760
        %1513 = vmatpush1.xpose.msra.mxu0 %v1512
        %1514 = vmatprep.subr.mxu0 0.0
        %v1515 = vand.u32 %v1467, 4294901760
        %1516 = vmatpush1.xpose.msra.mxu0 %v1515
        %1517 = vmatprep.subr.mxu0 0.0
        %v1518 = vand.u32 %v1470, 4294901760
        %1519 = vmatpush1.xpose.msra.mxu0 %v1518
        %1520 = vmatprep.subr.mxu0 0.0
        %v1521 = vand.u32 %v1473, 4294901760
        %1522 = vmatpush1.xpose.msra.mxu0 %v1521
        %1523 = vmatprep.subr.mxu0 0.0
        %v1524 = vand.u32 %v1476, 4294901760
        %1525 = vmatpush1.xpose.msra.mxu0 %v1524
        %1526 = vmatprep.subr.mxu0 0.0
        %1527 = vmatpush1.xpose.msra.mxu0 0.0
        %1528 = vmatprep.subr.mxu0 0.0
        %1529 = vmatpush1.xpose.msra.mxu0 0.0
        %1530 = vmatprep.subr.mxu0 0.0
        %1531 = vmatpush1.xpose.msra.mxu0 0.0
        %1532 = vmatprep.subr.mxu0 0.0
        %1533 = vmatpush1.xpose.msra.mxu0 0.0
        %1534 = vmatprep.subr.mxu0 0.0
        %1535 = vmatpush1.xpose.msra.mxu0 0.0
        %1536 = vmatprep.subr.mxu0 0.0
        %1537 = vmatpush1.xpose.msra.mxu0 0.0
        %1538 = vmatprep.subr.mxu0 0.0
        %1539 = vmatpush1.xpose.msra.mxu0 0.0
        %1540 = vmatprep.subr.mxu0 0.0
        %1541 = vmatpush1.xpose.msra.mxu0 0.0
        %1542 = vmatprep.subr.mxu0 0.0
        %1543 = vmatpush1.xpose.msra.mxu0 0.0
        %1544 = vmatprep.subr.mxu0 0.0
        %1545 = vmatpush1.xpose.msra.mxu0 0.0
        %1546 = vmatprep.subr.mxu0 0.0
        %1547 = vmatpush1.xpose.msra.mxu0 0.0
        %1548 = vmatprep.subr.mxu0 0.0
        %1549 = vmatpush1.xpose.msra.mxu0 0.0
        %1550 = vmatprep.subr.mxu0 0.0
        %1551 = vmatpush1.xpose.msra.mxu0 0.0
        %1552 = vmatprep.subr.mxu0 0.0
        %1553 = vmatpush1.xpose.msra.mxu0 0.0
        %1554 = vmatprep.subr.mxu0 0.0
        %1555 = vmatpush1.xpose.msra.mxu0 0.0
        %1556 = vmatprep.subr.mxu0 0.0
        %1557 = vmatpush1.xpose.msra.mxu0 0.0
        %1558 = vmatprep.mubr.f32.mxu0 0.0
        %v1559 = vand.u32 %v1428, 4294901760
        %v1560 = vsub.f32 %v1428, %v1559
        %v1561 = vand.u32 %v1560, 4294901760
        %v1562 = vsub.f32 %v1560, %v1561
        %v1563 = vand.u32 %v1562, 4294901760
        %1564 = vmatmul.mubr.f32.gmra.mrb[0].mxu0 %v1563
        %v1565 = vpop.f32.mrb[0].mxu0
        %v1566 = vadd.f32 0.0, %v1565
        %v1567 = vpop.f32.mrb[0].mxu0
        %1568 = vdwg.mxu0
        %1569 = vmatprep.subr.mxu0 0.0
        %v1570 = vand.u32 %v1431, 4294901760
        %v1571 = vsub.f32 %v1431, %v1570
        %v1572 = vand.u32 %v1571, 4294901760
        %v1573 = vsub.f32 %v1571, %v1572
        %v1574 = vand.u32 %v1573, 4294901760
        %1575 = vmatpush1.xpose.msra.mxu0 %v1574
        %1576 = vmatprep.subr.mxu0 0.0
        %v1577 = vand.u32 %v1434, 4294901760
        %v1578 = vsub.f32 %v1434, %v1577
        %v1579 = vand.u32 %v1578, 4294901760
        %v1580 = vsub.f32 %v1578, %v1579
        %v1581 = vand.u32 %v1580, 4294901760
        %1582 = vmatpush1.xpose.msra.mxu0 %v1581
        %1583 = vmatprep.subr.mxu0 0.0
        %v1584 = vand.u32 %v1437, 4294901760
        %v1585 = vsub.f32 %v1437, %v1584
        %v1586 = vand.u32 %v1585, 4294901760
        %v1587 = vsub.f32 %v1585, %v1586
        %v1588 = vand.u32 %v1587, 4294901760
        %1589 = vmatpush1.xpose.msra.mxu0 %v1588
        %1590 = vmatprep.subr.mxu0 0.0
        %v1591 = vand.u32 %v1440, 4294901760
        %v1592 = vsub.f32 %v1440, %v1591
        %v1593 = vand.u32 %v1592, 4294901760
        %v1594 = vsub.f32 %v1592, %v1593
        %v1595 = vand.u32 %v1594, 4294901760
        %1596 = vmatpush1.xpose.msra.mxu0 %v1595
        %1597 = vmatprep.subr.mxu0 0.0
        %v1598 = vand.u32 %v1443, 4294901760
        %v1599 = vsub.f32 %v1443, %v1598
        %v1600 = vand.u32 %v1599, 4294901760
        %v1601 = vsub.f32 %v1599, %v1600
        %v1602 = vand.u32 %v1601, 4294901760
        %1603 = vmatpush1.xpose.msra.mxu0 %v1602
        %1604 = vmatprep.subr.mxu0 0.0
        %v1605 = vand.u32 %v1446, 4294901760
        %v1606 = vsub.f32 %v1446, %v1605
        %v1607 = vand.u32 %v1606, 4294901760
        %v1608 = vsub.f32 %v1606, %v1607
        %v1609 = vand.u32 %v1608, 4294901760
        %1610 = vmatpush1.xpose.msra.mxu0 %v1609
        %1611 = vmatprep.subr.mxu0 0.0
        %v1612 = vand.u32 %v1449, 4294901760
        %v1613 = vsub.f32 %v1449, %v1612
        %v1614 = vand.u32 %v1613, 4294901760
        %v1615 = vsub.f32 %v1613, %v1614
        %v1616 = vand.u32 %v1615, 4294901760
        %1617 = vmatpush1.xpose.msra.mxu0 %v1616
        %1618 = vmatprep.subr.mxu0 0.0
        %v1619 = vand.u32 %v1452, 4294901760
        %v1620 = vsub.f32 %v1452, %v1619
        %v1621 = vand.u32 %v1620, 4294901760
        %v1622 = vsub.f32 %v1620, %v1621
        %v1623 = vand.u32 %v1622, 4294901760
        %1624 = vmatpush1.xpose.msra.mxu0 %v1623
        %1625 = vmatprep.subr.mxu0 0.0
        %v1626 = vand.u32 %v1455, 4294901760
        %v1627 = vsub.f32 %v1455, %v1626
        %v1628 = vand.u32 %v1627, 4294901760
        %v1629 = vsub.f32 %v1627, %v1628
        %v1630 = vand.u32 %v1629, 4294901760
        %1631 = vmatpush1.xpose.msra.mxu0 %v1630
        %1632 = vmatprep.subr.mxu0 0.0
        %v1633 = vand.u32 %v1458, 4294901760
        %v1634 = vsub.f32 %v1458, %v1633
        %v1635 = vand.u32 %v1634, 4294901760
        %v1636 = vsub.f32 %v1634, %v1635
        %v1637 = vand.u32 %v1636, 4294901760
        %1638 = vmatpush1.xpose.msra.mxu0 %v1637
        %1639 = vmatprep.subr.mxu0 0.0
        %v1640 = vand.u32 %v1461, 4294901760
        %v1641 = vsub.f32 %v1461, %v1640
        %v1642 = vand.u32 %v1641, 4294901760
        %v1643 = vsub.f32 %v1641, %v1642
        %v1644 = vand.u32 %v1643, 4294901760
        %1645 = vmatpush1.xpose.msra.mxu0 %v1644
        %1646 = vmatprep.subr.mxu0 0.0
        %v1647 = vand.u32 %v1464, 4294901760
        %v1648 = vsub.f32 %v1464, %v1647
        %v1649 = vand.u32 %v1648, 4294901760
        %v1650 = vsub.f32 %v1648, %v1649
        %v1651 = vand.u32 %v1650, 4294901760
        %1652 = vmatpush1.xpose.msra.mxu0 %v1651
        %1653 = vmatprep.subr.mxu0 0.0
        %v1654 = vand.u32 %v1467, 4294901760
        %v1655 = vsub.f32 %v1467, %v1654
        %v1656 = vand.u32 %v1655, 4294901760
        %v1657 = vsub.f32 %v1655, %v1656
        %v1658 = vand.u32 %v1657, 4294901760
        %1659 = vmatpush1.xpose.msra.mxu0 %v1658
        %1660 = vmatprep.subr.mxu0 0.0
        %v1661 = vand.u32 %v1470, 4294901760
        %v1662 = vsub.f32 %v1470, %v1661
        %v1663 = vand.u32 %v1662, 4294901760
        %v1664 = vsub.f32 %v1662, %v1663
        %v1665 = vand.u32 %v1664, 4294901760
        %1666 = vmatpush1.xpose.msra.mxu0 %v1665
        %1667 = vmatprep.subr.mxu0 0.0
        %v1668 = vand.u32 %v1473, 4294901760
        %v1669 = vsub.f32 %v1473, %v1668
        %v1670 = vand.u32 %v1669, 4294901760
        %v1671 = vsub.f32 %v1669, %v1670
        %v1672 = vand.u32 %v1671, 4294901760
        %1673 = vmatpush1.xpose.msra.mxu0 %v1672
        %1674 = vmatprep.subr.mxu0 0.0
        %v1675 = vand.u32 %v1476, 4294901760
        %v1676 = vsub.f32 %v1476, %v1675
        %v1677 = vand.u32 %v1676, 4294901760
        %v1678 = vsub.f32 %v1676, %v1677
        %v1679 = vand.u32 %v1678, 4294901760
        %1680 = vmatpush1.xpose.msra.mxu0 %v1679
        %1681 = vmatprep.subr.mxu0 0.0
        %1682 = vmatpush1.xpose.msra.mxu0 0.0
        %1683 = vmatprep.subr.mxu0 0.0
        %1684 = vmatpush1.xpose.msra.mxu0 0.0
        %1685 = vmatprep.subr.mxu0 0.0
        %1686 = vmatpush1.xpose.msra.mxu0 0.0
        %1687 = vmatprep.subr.mxu0 0.0
        %1688 = vmatpush1.xpose.msra.mxu0 0.0
        %1689 = vmatprep.subr.mxu0 0.0
        %1690 = vmatpush1.xpose.msra.mxu0 0.0
        %1691 = vmatprep.subr.mxu0 0.0
        %1692 = vmatpush1.xpose.msra.mxu0 0.0
        %1693 = vmatprep.subr.mxu0 0.0
        %1694 = vmatpush1.xpose.msra.mxu0 0.0
        %1695 = vmatprep.subr.mxu0 0.0
        %1696 = vmatpush1.xpose.msra.mxu0 0.0
        %1697 = vmatprep.subr.mxu0 0.0
        %1698 = vmatpush1.xpose.msra.mxu0 0.0
        %1699 = vmatprep.subr.mxu0 0.0
        %1700 = vmatpush1.xpose.msra.mxu0 0.0
        %1701 = vmatprep.subr.mxu0 0.0
        %1702 = vmatpush1.xpose.msra.mxu0 0.0
        %1703 = vmatprep.subr.mxu0 0.0
        %1704 = vmatpush1.xpose.msra.mxu0 0.0
        %1705 = vmatprep.subr.mxu0 0.0
        %1706 = vmatpush1.xpose.msra.mxu0 0.0
        %1707 = vmatprep.subr.mxu0 0.0
        %1708 = vmatpush1.xpose.msra.mxu0 0.0
        %1709 = vmatprep.subr.mxu0 0.0
        %1710 = vmatpush1.xpose.msra.mxu0 0.0
        %1711 = vmatprep.subr.mxu0 0.0
        %1712 = vmatpush1.xpose.msra.mxu0 0.0
        %1713 = vmatprep.mubr.f32.mxu0 0.0
        %v1714 = vand.u32 %v1428, 4294901760
        %1715 = vmatmul.mubr.f32.gmra.mrb[0].mxu0 %v1714
        %v1716 = vpop.f32.mrb[0].mxu0
        %v1717 = vadd.f32 %v1566, %v1716
        %v1718 = vpop.f32.mrb[0].mxu0
        %1719 = vdwg.mxu0
        %1720 = vmatprep.subr.mxu0 0.0
        %v1721 = vand.u32 %v1431, 4294901760
        %v1722 = vsub.f32 %v1431, %v1721
        %1723 = vmatpush1.xpose.msra.mxu0 %v1722
        %1724 = vmatprep.subr.mxu0 0.0
        %v1725 = vand.u32 %v1434, 4294901760
        %v1726 = vsub.f32 %v1434, %v1725
        %1727 = vmatpush1.xpose.msra.mxu0 %v1726
        %1728 = vmatprep.subr.mxu0 0.0
        %v1729 = vand.u32 %v1437, 4294901760
        %v1730 = vsub.f32 %v1437, %v1729
        %1731 = vmatpush1.xpose.msra.mxu0 %v1730
        %1732 = vmatprep.subr.mxu0 0.0
        %v1733 = vand.u32 %v1440, 4294901760
        %v1734 = vsub.f32 %v1440, %v1733
        %1735 = vmatpush1.xpose.msra.mxu0 %v1734
        %1736 = vmatprep.subr.mxu0 0.0
        %v1737 = vand.u32 %v1443, 4294901760
        %v1738 = vsub.f32 %v1443, %v1737
        %1739 = vmatpush1.xpose.msra.mxu0 %v1738
        %1740 = vmatprep.subr.mxu0 0.0
        %v1741 = vand.u32 %v1446, 4294901760
        %v1742 = vsub.f32 %v1446, %v1741
        %1743 = vmatpush1.xpose.msra.mxu0 %v1742
        %1744 = vmatprep.subr.mxu0 0.0
        %v1745 = vand.u32 %v1449, 4294901760
        %v1746 = vsub.f32 %v1449, %v1745
        %1747 = vmatpush1.xpose.msra.mxu0 %v1746
        %1748 = vmatprep.subr.mxu0 0.0
        %v1749 = vand.u32 %v1452, 4294901760
        %v1750 = vsub.f32 %v1452, %v1749
        %1751 = vmatpush1.xpose.msra.mxu0 %v1750
        %1752 = vmatprep.subr.mxu0 0.0
        %v1753 = vand.u32 %v1455, 4294901760
        %v1754 = vsub.f32 %v1455, %v1753
        %1755 = vmatpush1.xpose.msra.mxu0 %v1754
        %1756 = vmatprep.subr.mxu0 0.0
        %v1757 = vand.u32 %v1458, 4294901760
        %v1758 = vsub.f32 %v1458, %v1757
        %1759 = vmatpush1.xpose.msra.mxu0 %v1758
        %1760 = vmatprep.subr.mxu0 0.0
        %v1761 = vand.u32 %v1461, 4294901760
        %v1762 = vsub.f32 %v1461, %v1761
        %1763 = vmatpush1.xpose.msra.mxu0 %v1762
        %1764 = vmatprep.subr.mxu0 0.0
        %v1765 = vand.u32 %v1464, 4294901760
        %v1766 = vsub.f32 %v1464, %v1765
        %1767 = vmatpush1.xpose.msra.mxu0 %v1766
        %1768 = vmatprep.subr.mxu0 0.0
        %v1769 = vand.u32 %v1467, 4294901760
        %v1770 = vsub.f32 %v1467, %v1769
        %1771 = vmatpush1.xpose.msra.mxu0 %v1770
        %1772 = vmatprep.subr.mxu0 0.0
        %v1773 = vand.u32 %v1470, 4294901760
        %v1774 = vsub.f32 %v1470, %v1773
        %1775 = vmatpush1.xpose.msra.mxu0 %v1774
        %1776 = vmatprep.subr.mxu0 0.0
        %v1777 = vand.u32 %v1473, 4294901760
        %v1778 = vsub.f32 %v1473, %v1777
        %1779 = vmatpush1.xpose.msra.mxu0 %v1778
        %1780 = vmatprep.subr.mxu0 0.0
        %v1781 = vand.u32 %v1476, 4294901760
        %v1782 = vsub.f32 %v1476, %v1781
        %1783 = vmatpush1.xpose.msra.mxu0 %v1782
        %1784 = vmatprep.subr.mxu0 0.0
        %1785 = vmatpush1.xpose.msra.mxu0 0.0
        %1786 = vmatprep.subr.mxu0 0.0
        %1787 = vmatpush1.xpose.msra.mxu0 0.0
        %1788 = vmatprep.subr.mxu0 0.0
        %1789 = vmatpush1.xpose.msra.mxu0 0.0
        %1790 = vmatprep.subr.mxu0 0.0
        %1791 = vmatpush1.xpose.msra.mxu0 0.0
        %1792 = vmatprep.subr.mxu0 0.0
        %1793 = vmatpush1.xpose.msra.mxu0 0.0
        %1794 = vmatprep.subr.mxu0 0.0
        %1795 = vmatpush1.xpose.msra.mxu0 0.0
        %1796 = vmatprep.subr.mxu0 0.0
        %1797 = vmatpush1.xpose.msra.mxu0 0.0
        %1798 = vmatprep.subr.mxu0 0.0
        %1799 = vmatpush1.xpose.msra.mxu0 0.0
        %1800 = vmatprep.subr.mxu0 0.0
        %1801 = vmatpush1.xpose.msra.mxu0 0.0
        %1802 = vmatprep.subr.mxu0 0.0
        %1803 = vmatpush1.xpose.msra.mxu0 0.0
        %1804 = vmatprep.subr.mxu0 0.0
        %1805 = vmatpush1.xpose.msra.mxu0 0.0
        %1806 = vmatprep.subr.mxu0 0.0
        %1807 = vmatpush1.xpose.msra.mxu0 0.0
        %1808 = vmatprep.subr.mxu0 0.0
        %1809 = vmatpush1.xpose.msra.mxu0 0.0
        %1810 = vmatprep.subr.mxu0 0.0
        %1811 = vmatpush1.xpose.msra.mxu0 0.0
        %1812 = vmatprep.subr.mxu0 0.0
        %1813 = vmatpush1.xpose.msra.mxu0 0.0
        %1814 = vmatprep.subr.mxu0 0.0
        %1815 = vmatpush1.xpose.msra.mxu0 0.0
        %1816 = vmatprep.mubr.f32.mxu0 0.0
        %v1817 = vand.u32 %v1428, 4294901760
        %v1818 = vsub.f32 %v1428, %v1817
        %1819 = vmatmul.mubr.f32.gmra.mrb[0].mxu0 %v1818
        %v1820 = vpop.f32.mrb[0].mxu0
        %v1821 = vadd.f32 %v1717, %v1820
        %v1822 = vpop.f32.mrb[0].mxu0
        %1823 = vdwg.mxu0
        %1824 = vmatprep.subr.mxu0 0.0
        %v1825 = vand.u32 %v1431, 4294901760
        %1826 = vmatpush1.xpose.msra.mxu0 %v1825
        %1827 = vmatprep.subr.mxu0 0.0
        %v1828 = vand.u32 %v1434, 4294901760
        %1829 = vmatpush1.xpose.msra.mxu0 %v1828
        %1830 = vmatprep.subr.mxu0 0.0
        %v1831 = vand.u32 %v1437, 4294901760
        %1832 = vmatpush1.xpose.msra.mxu0 %v1831
        %1833 = vmatprep.subr.mxu0 0.0
        %v1834 = vand.u32 %v1440, 4294901760
        %1835 = vmatpush1.xpose.msra.mxu0 %v1834
        %1836 = vmatprep.subr.mxu0 0.0
        %v1837 = vand.u32 %v1443, 4294901760
        %1838 = vmatpush1.xpose.msra.mxu0 %v1837
        %1839 = vmatprep.subr.mxu0 0.0
        %v1840 = vand.u32 %v1446, 4294901760
        %1841 = vmatpush1.xpose.msra.mxu0 %v1840
        %1842 = vmatprep.subr.mxu0 0.0
        %v1843 = vand.u32 %v1449, 4294901760
        %1844 = vmatpush1.xpose.msra.mxu0 %v1843
        %1845 = vmatprep.subr.mxu0 0.0
        %v1846 = vand.u32 %v1452, 4294901760
        %1847 = vmatpush1.xpose.msra.mxu0 %v1846
        %1848 = vmatprep.subr.mxu0 0.0
        %v1849 = vand.u32 %v1455, 4294901760
        %1850 = vmatpush1.xpose.msra.mxu0 %v1849
        %1851 = vmatprep.subr.mxu0 0.0
        %v1852 = vand.u32 %v1458, 4294901760
        %1853 = vmatpush1.xpose.msra.mxu0 %v1852
        %1854 = vmatprep.subr.mxu0 0.0
        %v1855 = vand.u32 %v1461, 4294901760
        %1856 = vmatpush1.xpose.msra.mxu0 %v1855
        %1857 = vmatprep.subr.mxu0 0.0
        %v1858 = vand.u32 %v1464, 4294901760
        %1859 = vmatpush1.xpose.msra.mxu0 %v1858
        %1860 = vmatprep.subr.mxu0 0.0
        %v1861 = vand.u32 %v1467, 4294901760
        %1862 = vmatpush1.xpose.msra.mxu0 %v1861
        %1863 = vmatprep.subr.mxu0 0.0
        %v1864 = vand.u32 %v1470, 4294901760
        %1865 = vmatpush1.xpose.msra.mxu0 %v1864
        %1866 = vmatprep.subr.mxu0 0.0
        %v1867 = vand.u32 %v1473, 4294901760
        %1868 = vmatpush1.xpose.msra.mxu0 %v1867
        %1869 = vmatprep.subr.mxu0 0.0
        %v1870 = vand.u32 %v1476, 4294901760
        %1871 = vmatpush1.xpose.msra.mxu0 %v1870
        %1872 = vmatprep.subr.mxu0 0.0
        %1873 = vmatpush1.xpose.msra.mxu0 0.0
        %1874 = vmatprep.subr.mxu0 0.0
        %1875 = vmatpush1.xpose.msra.mxu0 0.0
        %1876 = vmatprep.subr.mxu0 0.0
        %1877 = vmatpush1.xpose.msra.mxu0 0.0
        %1878 = vmatprep.subr.mxu0 0.0
        %1879 = vmatpush1.xpose.msra.mxu0 0.0
        %1880 = vmatprep.subr.mxu0 0.0
        %1881 = vmatpush1.xpose.msra.mxu0 0.0
        %1882 = vmatprep.subr.mxu0 0.0
        %1883 = vmatpush1.xpose.msra.mxu0 0.0
        %1884 = vmatprep.subr.mxu0 0.0
        %1885 = vmatpush1.xpose.msra.mxu0 0.0
        %1886 = vmatprep.subr.mxu0 0.0
        %1887 = vmatpush1.xpose.msra.mxu0 0.0
        %1888 = vmatprep.subr.mxu0 0.0
        %1889 = vmatpush1.xpose.msra.mxu0 0.0
        %1890 = vmatprep.subr.mxu0 0.0
        %1891 = vmatpush1.xpose.msra.mxu0 0.0
        %1892 = vmatprep.subr.mxu0 0.0
        %1893 = vmatpush1.xpose.msra.mxu0 0.0
        %1894 = vmatprep.subr.mxu0 0.0
        %1895 = vmatpush1.xpose.msra.mxu0 0.0
        %1896 = vmatprep.subr.mxu0 0.0
        %1897 = vmatpush1.xpose.msra.mxu0 0.0
        %1898 = vmatprep.subr.mxu0 0.0
        %1899 = vmatpush1.xpose.msra.mxu0 0.0
        %1900 = vmatprep.subr.mxu0 0.0
        %1901 = vmatpush1.xpose.msra.mxu0 0.0
        %1902 = vmatprep.subr.mxu0 0.0
        %1903 = vmatpush1.xpose.msra.mxu0 0.0
        %1904 = vmatprep.mubr.f32.mxu0 0.0
        %v1905 = vand.u32 %v1428, 4294901760
        %v1906 = vsub.f32 %v1428, %v1905
        %v1907 = vand.u32 %v1906, 4294901760
        %1908 = vmatmul.mubr.f32.gmra.mrb[0].mxu0 %v1907
        %v1909 = vpop.f32.mrb[0].mxu0
        %v1910 = vadd.f32 %v1821, %v1909
        %v1911 = vpop.f32.mrb[0].mxu0
        %1912 = vdwg.mxu0
        %1913 = vmatprep.subr.mxu0 0.0
        %v1914 = vand.u32 %v1431, 4294901760
        %v1915 = vsub.f32 %v1431, %v1914
        %v1916 = vand.u32 %v1915, 4294901760
        %1917 = vmatpush1.xpose.msra.mxu0 %v1916
        %1918 = vmatprep.subr.mxu0 0.0
        %v1919 = vand.u32 %v1434, 4294901760
        %v1920 = vsub.f32 %v1434, %v1919
        %v1921 = vand.u32 %v1920, 4294901760
        %1922 = vmatpush1.xpose.msra.mxu0 %v1921
        %1923 = vmatprep.subr.mxu0 0.0
        %v1924 = vand.u32 %v1437, 4294901760
        %v1925 = vsub.f32 %v1437, %v1924
        %v1926 = vand.u32 %v1925, 4294901760
        %1927 = vmatpush1.xpose.msra.mxu0 %v1926
        %1928 = vmatprep.subr.mxu0 0.0
        %v1929 = vand.u32 %v1440, 4294901760
        %v1930 = vsub.f32 %v1440, %v1929
        %v1931 = vand.u32 %v1930, 4294901760
        %1932 = vmatpush1.xpose.msra.mxu0 %v1931
        %1933 = vmatprep.subr.mxu0 0.0
        %v1934 = vand.u32 %v1443, 4294901760
        %v1935 = vsub.f32 %v1443, %v1934
        %v1936 = vand.u32 %v1935, 4294901760
        %1937 = vmatpush1.xpose.msra.mxu0 %v1936
        %1938 = vmatprep.subr.mxu0 0.0
        %v1939 = vand.u32 %v1446, 4294901760
        %v1940 = vsub.f32 %v1446, %v1939
        %v1941 = vand.u32 %v1940, 4294901760
        %1942 = vmatpush1.xpose.msra.mxu0 %v1941
        %1943 = vmatprep.subr.mxu0 0.0
        %v1944 = vand.u32 %v1449, 4294901760
        %v1945 = vsub.f32 %v1449, %v1944
        %v1946 = vand.u32 %v1945, 4294901760
        %1947 = vmatpush1.xpose.msra.mxu0 %v1946
        %1948 = vmatprep.subr.mxu0 0.0
        %v1949 = vand.u32 %v1452, 4294901760
        %v1950 = vsub.f32 %v1452, %v1949
        %v1951 = vand.u32 %v1950, 4294901760
        %1952 = vmatpush1.xpose.msra.mxu0 %v1951
        %1953 = vmatprep.subr.mxu0 0.0
        %v1954 = vand.u32 %v1455, 4294901760
        %v1955 = vsub.f32 %v1455, %v1954
        %v1956 = vand.u32 %v1955, 4294901760
        %1957 = vmatpush1.xpose.msra.mxu0 %v1956
        %1958 = vmatprep.subr.mxu0 0.0
        %v1959 = vand.u32 %v1458, 4294901760
        %v1960 = vsub.f32 %v1458, %v1959
        %v1961 = vand.u32 %v1960, 4294901760
        %1962 = vmatpush1.xpose.msra.mxu0 %v1961
        %1963 = vmatprep.subr.mxu0 0.0
        %v1964 = vand.u32 %v1461, 4294901760
        %v1965 = vsub.f32 %v1461, %v1964
        %v1966 = vand.u32 %v1965, 4294901760
        %1967 = vmatpush1.xpose.msra.mxu0 %v1966
        %1968 = vmatprep.subr.mxu0 0.0
        %v1969 = vand.u32 %v1464, 4294901760
        %v1970 = vsub.f32 %v1464, %v1969
        %v1971 = vand.u32 %v1970, 4294901760
        %1972 = vmatpush1.xpose.msra.mxu0 %v1971
        %1973 = vmatprep.subr.mxu0 0.0
        %v1974 = vand.u32 %v1467, 4294901760
        %v1975 = vsub.f32 %v1467, %v1974
        %v1976 = vand.u32 %v1975, 4294901760
        %1977 = vmatpush1.xpose.msra.mxu0 %v1976
        %1978 = vmatprep.subr.mxu0 0.0
        %v1979 = vand.u32 %v1470, 4294901760
        %v1980 = vsub.f32 %v1470, %v1979
        %v1981 = vand.u32 %v1980, 4294901760
        %1982 = vmatpush1.xpose.msra.mxu0 %v1981
        %1983 = vmatprep.subr.mxu0 0.0
        %v1984 = vand.u32 %v1473, 4294901760
        %v1985 = vsub.f32 %v1473, %v1984
        %v1986 = vand.u32 %v1985, 4294901760
        %1987 = vmatpush1.xpose.msra.mxu0 %v1986
        %1988 = vmatprep.subr.mxu0 0.0
        %v1989 = vand.u32 %v1476, 4294901760
        %v1990 = vsub.f32 %v1476, %v1989
        %v1991 = vand.u32 %v1990, 4294901760
        %1992 = vmatpush1.xpose.msra.mxu0 %v1991
        %1993 = vmatprep.subr.mxu0 0.0
        %1994 = vmatpush1.xpose.msra.mxu0 0.0
        %1995 = vmatprep.subr.mxu0 0.0
        %1996 = vmatpush1.xpose.msra.mxu0 0.0
        %1997 = vmatprep.subr.mxu0 0.0
        %1998 = vmatpush1.xpose.msra.mxu0 0.0
        %1999 = vmatprep.subr.mxu0 0.0
        %2000 = vmatpush1.xpose.msra.mxu0 0.0
        %2001 = vmatprep.subr.mxu0 0.0
        %2002 = vmatpush1.xpose.msra.mxu0 0.0
        %2003 = vmatprep.subr.mxu0 0.0
        %2004 = vmatpush1.xpose.msra.mxu0 0.0
        %2005 = vmatprep.subr.mxu0 0.0
        %2006 = vmatpush1.xpose.msra.mxu0 0.0
        %2007 = vmatprep.subr.mxu0 0.0
        %2008 = vmatpush1.xpose.msra.mxu0 0.0
        %2009 = vmatprep.subr.mxu0 0.0
        %2010 = vmatpush1.xpose.msra.mxu0 0.0
        %2011 = vmatprep.subr.mxu0 0.0
        %2012 = vmatpush1.xpose.msra.mxu0 0.0
        %2013 = vmatprep.subr.mxu0 0.0
        %2014 = vmatpush1.xpose.msra.mxu0 0.0
        %2015 = vmatprep.subr.mxu0 0.0
        %2016 = vmatpush1.xpose.msra.mxu0 0.0
        %2017 = vmatprep.subr.mxu0 0.0
        %2018 = vmatpush1.xpose.msra.mxu0 0.0
        %2019 = vmatprep.subr.mxu0 0.0
        %2020 = vmatpush1.xpose.msra.mxu0 0.0
        %2021 = vmatprep.subr.mxu0 0.0
        %2022 = vmatpush1.xpose.msra.mxu0 0.0
        %2023 = vmatprep.subr.mxu0 0.0
        %2024 = vmatpush1.xpose.msra.mxu0 0.0
        %2025 = vmatprep.mubr.f32.mxu0 0.0
        %v2026 = vand.u32 %v1428, 4294901760
        %2027 = vmatmul.mubr.f32.gmra.mrb[0].mxu0 %v2026
        %v2028 = vpop.f32.mrb[0].mxu0
        %v2029 = vadd.f32 %v1910, %v2028
        %v2030 = vpop.f32.mrb[0].mxu0
        %2031 = vdwg.mxu0
        %2032 = vmatprep.subr.mxu0 0.0
        %v2033 = vand.u32 %v1431, 4294901760
        %2034 = vmatpush1.xpose.msra.mxu0 %v2033
        %2035 = vmatprep.subr.mxu0 0.0
        %v2036 = vand.u32 %v1434, 4294901760
        %2037 = vmatpush1.xpose.msra.mxu0 %v2036
        %2038 = vmatprep.subr.mxu0 0.0
        %v2039 = vand.u32 %v1437, 4294901760
        %2040 = vmatpush1.xpose.msra.mxu0 %v2039
        %2041 = vmatprep.subr.mxu0 0.0
        %v2042 = vand.u32 %v1440, 4294901760
        %2043 = vmatpush1.xpose.msra.mxu0 %v2042
        %2044 = vmatprep.subr.mxu0 0.0
        %v2045 = vand.u32 %v1443, 4294901760
        %2046 = vmatpush1.xpose.msra.mxu0 %v2045
        %2047 = vmatprep.subr.mxu0 0.0
        %v2048 = vand.u32 %v1446, 4294901760
        %2049 = vmatpush1.xpose.msra.mxu0 %v2048
        %2050 = vmatprep.subr.mxu0 0.0
        %v2051 = vand.u32 %v1449, 4294901760
        %2052 = vmatpush1.xpose.msra.mxu0 %v2051
        %2053 = vmatprep.subr.mxu0 0.0
        %v2054 = vand.u32 %v1452, 4294901760
        %2055 = vmatpush1.xpose.msra.mxu0 %v2054
        %2056 = vmatprep.subr.mxu0 0.0
        %v2057 = vand.u32 %v1455, 4294901760
        %2058 = vmatpush1.xpose.msra.mxu0 %v2057
        %2059 = vmatprep.subr.mxu0 0.0
        %v2060 = vand.u32 %v1458, 4294901760
        %2061 = vmatpush1.xpose.msra.mxu0 %v2060
        %2062 = vmatprep.subr.mxu0 0.0
        %v2063 = vand.u32 %v1461, 4294901760
        %2064 = vmatpush1.xpose.msra.mxu0 %v2063
        %2065 = vmatprep.subr.mxu0 0.0
        %v2066 = vand.u32 %v1464, 4294901760
        %2067 = vmatpush1.xpose.msra.mxu0 %v2066
        %2068 = vmatprep.subr.mxu0 0.0
        %v2069 = vand.u32 %v1467, 4294901760
        %2070 = vmatpush1.xpose.msra.mxu0 %v2069
        %2071 = vmatprep.subr.mxu0 0.0
        %v2072 = vand.u32 %v1470, 4294901760
        %2073 = vmatpush1.xpose.msra.mxu0 %v2072
        %2074 = vmatprep.subr.mxu0 0.0
        %v2075 = vand.u32 %v1473, 4294901760
        %2076 = vmatpush1.xpose.msra.mxu0 %v2075
        %2077 = vmatprep.subr.mxu0 0.0
        %v2078 = vand.u32 %v1476, 4294901760
        %2079 = vmatpush1.xpose.msra.mxu0 %v2078
        %2080 = vmatprep.subr.mxu0 0.0
        %2081 = vmatpush1.xpose.msra.mxu0 0.0
        %2082 = vmatprep.subr.mxu0 0.0
        %2083 = vmatpush1.xpose.msra.mxu0 0.0
        %2084 = vmatprep.subr.mxu0 0.0
        %2085 = vmatpush1.xpose.msra.mxu0 0.0
        %2086 = vmatprep.subr.mxu0 0.0
        %2087 = vmatpush1.xpose.msra.mxu0 0.0
        %2088 = vmatprep.subr.mxu0 0.0
        %2089 = vmatpush1.xpose.msra.mxu0 0.0
        %2090 = vmatprep.subr.mxu0 0.0
        %2091 = vmatpush1.xpose.msra.mxu0 0.0
        %2092 = vmatprep.subr.mxu0 0.0
        %2093 = vmatpush1.xpose.msra.mxu0 0.0
        %2094 = vmatprep.subr.mxu0 0.0
        %2095 = vmatpush1.xpose.msra.mxu0 0.0
        %2096 = vmatprep.subr.mxu0 0.0
        %2097 = vmatpush1.xpose.msra.mxu0 0.0
        %2098 = vmatprep.subr.mxu0 0.0
        %2099 = vmatpush1.xpose.msra.mxu0 0.0
        %2100 = vmatprep.subr.mxu0 0.0
        %2101 = vmatpush1.xpose.msra.mxu0 0.0
        %2102 = vmatprep.subr.mxu0 0.0
        %2103 = vmatpush1.xpose.msra.mxu0 0.0
        %2104 = vmatprep.subr.mxu0 0.0
        %2105 = vmatpush1.xpose.msra.mxu0 0.0
        %2106 = vmatprep.subr.mxu0 0.0
        %2107 = vmatpush1.xpose.msra.mxu0 0.0
        %2108 = vmatprep.subr.mxu0 0.0
        %2109 = vmatpush1.xpose.msra.mxu0 0.0
        %2110 = vmatprep.subr.mxu0 0.0
        %2111 = vmatpush1.xpose.msra.mxu0 0.0
        %2112 = vmatprep.mubr.f32.mxu0 0.0
        %v2113 = vand.u32 %v1428, 4294901760
        %2114 = vmatmul.mubr.f32.gmra.mrb[0].mxu0 %v2113
        %v2115 = vpop.f32.mrb[0].mxu0
        %v2116 = vadd.f32 %v2029, %v2115
        %v2117 = vpop.f32.mrb[0].mxu0
        %2118 = vdwg.mxu0
        %v2119 = vld [vmem:[%s392] sm:$0x1]
        %v2120 = vld [vmem:[%s392 + $0x1] sm:$0x1]
        %v2121 = vsub.f32 %v1424, 0.1
        %v2122 = vsub.f32 %v2116, 0.1
        %v2123 = vmul.f32 %v2121, %v2121
        %v2124 = vmul.f32 %v2122, %v2122
        %v2125 = vmul.f32 %v2123, -50.0
        %v2126 = vmul.f32 %v2124, -50.0
        %v2127 = vmul.f32 %v2125, 1.442695
        %v2128 = vpow.pop %v2127
        %v2129 = vmul.f32 %v2126, 1.442695
        %v2130 = vpow.pop %v2129
        %v2133 = vlaneseq
        %v2134 = vshrl.u32 %v2133, 7
        %v2135 = vsub.s32 0, %v2134
        %v2136 = vrot.slane %v2119, %v2135
        %v2137 = vlaneseq
        %v2138 = vshrl.u32 %v2137, 7
        %v2139 = vsub.s32 0, %v2138
        %v2140 = vrot.slane %v2120, %v2139
        %v2143 = vmul.f32 %v2128, %v2136
        %v2144 = vmul.f32 %v2130, %v2140
        %s2145 = scalar_lea.vmem %s421, 80 [#allocation5]
        %v2146 = vld [vmem:[%s2145] sm:$0xff]
        %v2147 = vld [vmem:[%s2145 + $0x8] sm:$0xff]
        %v2148 = vadd.f32 %v2146, %v2143
        %v2149 = vadd.f32 %v2147, %v2144
        %2150 = vst [vmem:[%s2145] sm:$0xff] %v2148
        %2151 = vst [vmem:[%s2145 + $0x8] sm:$0xff] %v2149
        %v2152 = vmul.f32 %v1424, 19.999998
        %v2153 = vmul.f32 %v2116, 19.999998
        %v2154 = vmul.f32 %v2152, 1.442695
        %v2155 = vpow.pop %v2154
        %v2156 = vmul.f32 %v2153, 1.442695
        %v2157 = vpow.pop %v2156
        %v2158 = vmul.f32 %v2143, %v2155
        %v2159 = vmul.f32 %v2144, %v2157
        %s2160 = scalar_lea.vmem %s421, 96 [#allocation5]
        %v2161 = vld [vmem:[%s2160] sm:$0xff]
        %v2162 = vld [vmem:[%s2160 + $0x8] sm:$0xff]
        %v2163 = vadd.f32 %v2161, %v2158
        %v2164 = vadd.f32 %v2162, %v2159
        %2165 = vst [vmem:[%s2160] sm:$0xff] %v2163
        %2166 = vst [vmem:[%s2160 + $0x8] sm:$0xff] %v2164
        %v2167 = vmul.f32 %v2158, %v2155
        %v2168 = vmul.f32 %v2159, %v2157
        %s2169 = scalar_lea.vmem %s421, 112 [#allocation5]
        %v2170 = vld [vmem:[%s2169] sm:$0xff]
        %v2171 = vld [vmem:[%s2169 + $0x8] sm:$0xff]
        %v2172 = vadd.f32 %v2170, %v2167
        %v2173 = vadd.f32 %v2171, %v2168
        %2174 = vst [vmem:[%s2169] sm:$0xff] %v2172
        %2175 = vst [vmem:[%s2169 + $0x8] sm:$0xff] %v2173
        %v2176 = vmul.f32 %v2167, %v2155
        %v2177 = vmul.f32 %v2168, %v2157
        %s2178 = scalar_lea.vmem %s421, 128 [#allocation5]
        %v2179 = vld [vmem:[%s2178] sm:$0xff]
        %v2180 = vld [vmem:[%s2178 + $0x8] sm:$0xff]
        %v2181 = vadd.f32 %v2179, %v2176
        %v2182 = vadd.f32 %v2180, %v2177
        %2183 = vst [vmem:[%s2178] sm:$0xff] %v2181
        %2184 = vst [vmem:[%s2178 + $0x8] sm:$0xff] %v2182
        %v2185 = vmul.f32 %v2176, %v2155
        %v2186 = vmul.f32 %v2177, %v2157
        %s2187 = scalar_lea.vmem %s421, 144 [#allocation5]
        %v2188 = vld [vmem:[%s2187] sm:$0xff]
        %v2189 = vld [vmem:[%s2187 + $0x8] sm:$0xff]
        %v2190 = vadd.f32 %v2188, %v2185
        %v2191 = vadd.f32 %v2189, %v2186
        %2192 = vst [vmem:[%s2187] sm:$0xff] %v2190
        %2193 = vst [vmem:[%s2187 + $0x8] sm:$0xff] %v2191
        %v2194 = vmul.f32 %v1424, -19.999998
        %v2195 = vmul.f32 %v2116, -19.999998
        %v2196 = vmul.f32 %v2194, 1.442695
        %v2197 = vpow.pop %v2196
        %v2198 = vmul.f32 %v2195, 1.442695
        %v2199 = vpow.pop %v2198
        %v2200 = vmul.f32 %v2143, %v2197
        %v2201 = vmul.f32 %v2144, %v2199
        %s2202 = scalar_lea.vmem %s421, 64 [#allocation5]
        %v2203 = vld [vmem:[%s2202] sm:$0xff]
        %v2204 = vld [vmem:[%s2202 + $0x8] sm:$0xff]
        %v2205 = vadd.f32 %v2203, %v2200
        %v2206 = vadd.f32 %v2204, %v2201
        %2207 = vst [vmem:[%s2202] sm:$0xff] %v2205
        %2208 = vst [vmem:[%s2202 + $0x8] sm:$0xff] %v2206
        %v2209 = vmul.f32 %v2200, %v2197
        %v2210 = vmul.f32 %v2201, %v2199
        %s2211 = scalar_lea.vmem %s421, 48 [#allocation5]
        %v2212 = vld [vmem:[%s2211] sm:$0xff]
        %v2213 = vld [vmem:[%s2211 + $0x8] sm:$0xff]
        %v2214 = vadd.f32 %v2212, %v2209
        %v2215 = vadd.f32 %v2213, %v2210
        %2216 = vst [vmem:[%s2211] sm:$0xff] %v2214
        %2217 = vst [vmem:[%s2211 + $0x8] sm:$0xff] %v2215
        %v2218 = vmul.f32 %v2209, %v2197
        %v2219 = vmul.f32 %v2210, %v2199
        %s2220 = scalar_lea.vmem %s421, 32 [#allocation5]
        %v2221 = vld [vmem:[%s2220] sm:$0xff]
        %v2222 = vld [vmem:[%s2220 + $0x8] sm:$0xff]
        %v2223 = vadd.f32 %v2221, %v2218
        %v2224 = vadd.f32 %v2222, %v2219
        %2225 = vst [vmem:[%s2220] sm:$0xff] %v2223
        %2226 = vst [vmem:[%s2220 + $0x8] sm:$0xff] %v2224
        %v2227 = vmul.f32 %v2218, %v2197
        %v2228 = vmul.f32 %v2219, %v2199
        %s2229 = scalar_lea.vmem %s421, 16 [#allocation5]
        %v2230 = vld [vmem:[%s2229] sm:$0xff]
        %v2231 = vld [vmem:[%s2229 + $0x8] sm:$0xff]
        %v2232 = vadd.f32 %v2230, %v2227
        %v2233 = vadd.f32 %v2231, %v2228
        %2234 = vst [vmem:[%s2229] sm:$0xff] %v2232
        %2235 = vst [vmem:[%s2229 + $0x8] sm:$0xff] %v2233
        %v2236 = vmul.f32 %v2227, %v2197
        %v2237 = vmul.f32 %v2228, %v2199
        %v2238 = vld [vmem:[%s421] sm:$0xff]
        %v2239 = vld [vmem:[%s421 + $0x8] sm:$0xff]
        %v2240 = vadd.f32 %v2238, %v2236
        %v2241 = vadd.f32 %v2239, %v2237
        %2242 = vst [vmem:[%s421] sm:$0xff] %v2240
        %2243 = vst [vmem:[%s421 + $0x8] sm:$0xff] %v2241
        %v2244 = vsub.f32 %v1424, 0.999
        %v2245 = vsub.f32 %v2116, 0.999
        %v2246 = vmul.f32 %v2244, %v2244
        %v2247 = vmul.f32 %v2245, %v2245
        %v2248 = vmul.f32 %v2246, -499999.94
        %v2249 = vmul.f32 %v2247, -499999.94
        %v2250 = vmul.f32 %v2248, 1.442695
        %v2251 = vpow.pop %v2250
        %v2252 = vmul.f32 %v2249, 1.442695
        %v2253 = vpow.pop %v2252
        %v2254 = vmul.f32 %v2251, %v2136
        %v2255 = vmul.f32 %v2253, %v2140
        %s2256 = scalar_lea.vmem %s421, 160 [#allocation5]
        %v2257 = vld [vmem:[%s2256] sm:$0xff]
        %v2258 = vld [vmem:[%s2256 + $0x8] sm:$0xff]
        %v2259 = vadd.f32 %v2257, %v2254
        %v2260 = vadd.f32 %v2258, %v2255
        %2261 = vst [vmem:[%s2256] sm:$0xff] %v2259
        %2262 = vst [vmem:[%s2256 + $0x8] sm:$0xff] %v2260
        %s2263 = sand.u32 %s119, 1
        %s2264 = scalar_lea.sflag [#allocation6], %s2263
        %s2265 = sand.u32 %s119, 1
        %s2266 = smul.addr %s2265, 176
        %s2267 = scalar_lea.vmem [#allocation5], %s2266
        // Predicated region
        $region109: #{tpu_custom_call.1} parent=95 // pred_check
          %p2268 = pneg %p129
        $region110: #{tpu_custom_call.1} parent=95 // pred_check_branch
          %2270 = sbr.rel (%p2268) target = $region112
        $region111: #{tpu_custom_call.1} parent=95 // pred_region
          %s2272 = ssub.s32 2816, 2816
          %2273 = vsyncadd %s2264, %s2272
          %s2274 = smul.addr %s21, 22
          %s2275 = smul.addr %s2274, 128
          %s2276 = scalar_lea.hbm %s3, %s2275
          %s2277 = sshll.u32 %s2267, 4
          %s2278 = int_to_ptr.vmem [resolvable:$true] %s2277
          %2283 = dma.vmem_to_hbm [thread:$0]  %s2278, 2816, %s2276, %s2264, 128, 128, 8
        $region112: #{tpu_custom_call.1} parent=95 // pred_fallthru
          _
      $region96: #{tpu_custom_call.1} parent=5 // pred_fallthru
        _
      %p2284 = scmp.le.s32.totalorder 2, %s12
      // Predicated region
      $region113: #{tpu_custom_call.1} parent=5 // pred_check
        %p2285 = pneg %p2284
      $region114: #{tpu_custom_call.1} parent=5 // pred_check_branch
        %2287 = sbr.rel (%p2285) target = $region116
      $region115: #{tpu_custom_call.1} parent=5 // pred_region
        %s2288 = ssub.s32 %s12, 2
        // Predicated region
        $region117: #{tpu_custom_call.1} parent=115 // pred_check
          %p2289 = pneg %p135
        $region118: #{tpu_custom_call.1} parent=115 // pred_check_branch
          %2291 = sbr.rel (%p2289) target = $region120
        $region119: #{tpu_custom_call.1} parent=115 // pred_region
          %s2292 = sand.u32 %s120, 1
          %s2293 = scalar_lea.sflag [#allocation6], %s2292
          %s2294 = sand.u32 %s120, 1
          %s2295 = smul.addr %s2294, 176
          %s2296 = scalar_lea.vmem [#allocation5], %s2295
          %2297 = dma.done %s2293, 2816
        $region120: #{tpu_custom_call.1} parent=115 // pred_fallthru
          _
      $region116: #{tpu_custom_call.1} parent=5 // pred_fallthru
        _
    $region6: #{tpu_custom_call.1} parent=1 // loop_footer
      %s16 = sadd.s32 1, %s12
    $region7: #{tpu_custom_call.1} parent=1 // loop_footer_branch
      %11 = sbr.rel target = $region3
    $region8: #{tpu_custom_call.1} parent=1 // loop_exit
      _
    %2298 = vsyncpa [#allocation6], 1
    %s2299 = scalar_lea.sflag [#allocation6], 1
    %2300 = vsyncpa %s2299, 1

</llo_original>
